<compile_context>
chip_gen: v6e
topology: v6e:2x2x1
jax: 0.10.0
libtpu: 0.0.40
codegen_flags: <defaults>
</compile_context>

<pallas_src>
import jax
import jax.numpy as jnp
from jax import lax
from jax.experimental import pallas as pl
from jax.experimental.pallas import tpu as pltpu


# ----------------------------------------------------------------------------
# One-time weight preprocessing (PyTorch layout -> MXU-friendly operands)
# ----------------------------------------------------------------------------
def _toeplitz_weight(w, w_in):
    """OIHW conv weight -> [KH, w_in*C, w_out*OC] banded matmul weights.

    With activations laid out as rows=(b, h), cols=(w*C + c), the conv is
        out[(b,h), w_out*OC+oc] = sum_kh  act[(b, h+kh), :] @ W[kh]
    """
    OC, C, KH, KW = w.shape
    w_out = w_in - KW + 1
    w_k = jnp.transpose(w, (2, 3, 1, 0))                    # [KH, KW, C, OC]
    wi = jnp.arange(w_in)[:, None]
    wo = jnp.arange(w_out)[None, :]
    kw = wi - wo                                            # [w_in, w_out]
    valid = (kw >= 0) & (kw < KW)
    kw_c = jnp.clip(kw, 0, KW - 1)
    g = w_k[:, kw_c]                                        # [KH, w_in, w_out, C, OC]
    g = jnp.where(valid[None, :, :, None, None], g, 0.0)
    g = jnp.transpose(g, (0, 1, 3, 2, 4))                   # [KH, w_in, C, w_out, OC]
    return g.reshape(KH, w_in * C, w_out * OC).astype(jnp.float32)


def _pool_h_matrix(h_in):
    """[h_in//2, h_in] matrix: 0.5 * (row 2p + row 2p+1)."""
    p = jnp.arange(h_in // 2)[:, None]
    h = jnp.arange(h_in)[None, :]
    return 0.5 * ((h == 2 * p) | (h == 2 * p + 1)).astype(jnp.float32)


def _pool_w_matrix(w_in, c):
    """[(w_in*c), (w_in//2*c)] matrix pooling the lane axis (w,c) -> (q,c)."""
    w = jnp.arange(w_in)[:, None]
    q = jnp.arange(w_in // 2)[None, :]
    sel = 0.5 * ((w == 2 * q) | (w == 2 * q + 1)).astype(jnp.float32)
    eye = jnp.eye(c, dtype=jnp.float32)
    return jnp.einsum("wq,cd->wcqd", sel, eye).reshape(w_in * c, (w_in // 2) * c)


def preprocess_params(params):
    """Run once, reuse for every inference call.

    Conv Toeplitz weights are pre-concatenated along kh (axis 0) so each conv
    is ONE matmul with K = KH * w_in * C inside the kernel (perf review item).
    """
    ops = {
        "w1": _toeplitz_weight(params["conv1_w"], 32).reshape(5 * 32, 28 * 6),   # [160, 168]
        "b1": jnp.tile(params["conv1_b"], 28)[None, :],                          # [1, 168]
        "ph1": _pool_h_matrix(28),                                               # [14, 28]
        "pw1": _pool_w_matrix(28, 6),                                            # [168, 84]
        "w2": _toeplitz_weight(params["conv2_w"], 14).reshape(5 * 84, 10 * 16),  # [420, 160]
        "b2": jnp.tile(params["conv2_b"], 10)[None, :],                          # [1, 160]
        "ph2": _pool_h_matrix(10),                                               # [5, 10]
        "pw2": _pool_w_matrix(10, 16),                                           # [160, 80]
        "w3": _toeplitz_weight(params["conv3_w"], 5).reshape(5 * 80, 120),       # [400, 120]
        "b3": params["conv3_b"][None, :],                                        # [1, 120]
        "wf1": params["fc1_w"].T,                                                # [120, 84]
        "bf1": params["fc1_b"][None, :],                                         # [1, 84]
        "wf2": params["fc2_w"].T,                                                # [84, 10]
        "bf2": params["fc2_b"][None, :],                                         # [1, 10]
    }
    return {k: v.astype(jnp.float32) for k, v in ops.items()}


_OP_NAMES = ("w1", "b1", "ph1", "pw1", "w2", "b2", "ph2", "pw2",
             "w3", "b3", "wf1", "bf1", "wf2", "bf2")


# ----------------------------------------------------------------------------
# The fused Pallas kernel (one grid step == one block of B_BLK images)
# ----------------------------------------------------------------------------
def _lenet5_kernel(x_ref, w1_ref, b1_ref, ph1_ref, pw1_ref,
                   w2_ref, b2_ref, ph2_ref, pw2_ref,
                   w3_ref, b3_ref, wf1_ref, bf1_ref, wf2_ref, bf2_ref,
                   out_ref):
    f32 = jnp.float32
    b = x_ref.shape[0]                       # images in this block

    def dot2d(a, w):                         # plain MXU matmul, f32 accumulate
        return jnp.dot(a, w, preferred_element_type=f32)

    def hpool(a3d, ph_ref):
        """2x avg-pool along H: batched matmul with the shared 0.5 matrix."""
        p, hh = ph_ref.shape
        ph_b = jnp.broadcast_to(ph_ref[...], (b, p, hh))
        return lax.dot_general(ph_b, a3d, (((2,), (1,)), ((0,), (0,))),
                               preferred_element_type=f32)

    x = x_ref[...]                                            # (b, 32, 32) padded

    # ---- conv1 (pad=2 pre-applied): single K-fused banded matmul, M = b*28 --
    slab = jnp.concatenate([x[:, kh:kh + 28, :] for kh in range(5)], axis=2)
    h = jnp.tanh(dot2d(slab.reshape(b * 28, 5 * 32), w1_ref[...]) + b1_ref[...])
    # ---- avg-pool1: W-pool (lane matmul) then H-pool (batched matmul) -------
    h = dot2d(h, pw1_ref[...]).reshape(b, 28, 84)
    h = hpool(h, ph1_ref)                                     # (b, 14, 84)

    # ---- conv2: single K-fused matmul, M = b*10, K = 420 --------------------
    slab = jnp.concatenate([h[:, kh:kh + 10, :] for kh in range(5)], axis=2)
    h = jnp.tanh(dot2d(slab.reshape(b * 10, 5 * 84), w2_ref[...]) + b2_ref[...])
    # ---- avg-pool2 -----------------------------------------------------------
    h = dot2d(h, pw2_ref[...]).reshape(b, 10, 80)
    h = hpool(h, ph2_ref)                                     # (b, 5, 80)

    # ---- conv3 (5x5 -> 1x1 spatial): slab = flattened pooled map, K = 400 ---
    slab = jnp.concatenate([h[:, kh:kh + 1, :] for kh in range(5)], axis=2)
    h = jnp.tanh(dot2d(slab[:, 0, :], w3_ref[...]) + b3_ref[...])   # (b, 120)

    # ---- fc1 + tanh, fc2, log_softmax (flatten order == PyTorch) ------------
    h = jnp.tanh(dot2d(h, wf1_ref[...]) + bf1_ref[...])             # (b, 84)
    logits = dot2d(h, wf2_ref[...]) + bf2_ref[...]                  # (b, 10)
    z = logits - jnp.max(logits, axis=-1, keepdims=True)
    out_ref[...] = z - jnp.log(jnp.sum(jnp.exp(z), axis=-1, keepdims=True))


# ----------------------------------------------------------------------------
# Forward wrapper
# ----------------------------------------------------------------------------
def lenet5_forward(ops, x, *, block_b=64):
    """x: [B, 1, 28, 28] float32 (NCHW / PyTorch).  Returns [B, 10] log-probs."""
    B = x.shape[0]
    # Boundary glue: drop the singleton channel and apply conv1's padding=2
    # once for the whole batch; everything else happens inside the kernel.
    xp = jnp.pad(x[:, 0].astype(jnp.float32), ((0, 0), (2, 2), (2, 2)))  # [B,32,32]

    # Block of images per grid step.  If multiple blocks are needed, keep the
    # block a multiple of 8 (output BlockSpec sublane rule) and pad the batch.
    b_blk = min(B, block_b)
    if b_blk < B:
        b_blk = max(8, (b_blk // 8) * 8)
    n_blk = -(-B // b_blk)
    b_pad = n_blk * b_blk
    if b_pad != B:
        xp = jnp.pad(xp, ((0, b_pad - B), (0, 0), (0, 0)))

    operands = [ops[n] for n in _OP_NAMES]

    def _const_index_map(nd):
        return lambda i: (0,) * nd

    in_specs = [pl.BlockSpec((b_blk, 32, 32), lambda i: (i, 0, 0))]
    in_specs += [pl.BlockSpec(a.shape, _const_index_map(a.ndim)) for a in operands]

    # Advisory cost estimate so XLA schedules around the fused call sensibly.
    macs_per_img = (28 * 160 * 168 + 28 * 168 * 84 + 14 * 28 * 84
                    + 10 * 420 * 160 + 10 * 160 * 80 + 5 * 10 * 80
                    + 400 * 120 + 120 * 84 + 84 * 10)
    trans_per_img = 28 * 168 + 10 * 160 + 120 + 84 + 10
    bytes_accessed = 4 * (xp.size + n_blk * sum(int(a.size) for a in operands)
                          + b_pad * 10)

    out = pl.pallas_call(
        _lenet5_kernel,
        grid=(n_blk,),
        in_specs=in_specs,
        out_specs=pl.BlockSpec((b_blk, 10), lambda i: (i, 0)),
        out_shape=jax.ShapeDtypeStruct((b_pad, 10), jnp.float32),
        compiler_params=pltpu.CompilerParams(
            dimension_semantics=("parallel",)),   # v7x: blocks shard across TCs
        cost_estimate=pl.CostEstimate(
            flops=2 * macs_per_img * b_pad,
            transcendentals=trans_per_img * b_pad,
            bytes_accessed=int(bytes_accessed)),
    )(xp, *operands)
    return out[:B]


# ----------------------------------------------------------------------------
# PyTorch-style params + pure-JAX reference (silent correctness check)
# ----------------------------------------------------------------------------
def init_params(key):
    """Deterministic init mimicking PyTorch's U(-1/sqrt(fan_in), 1/sqrt(fan_in))."""
    def uni(k, shape, fan_in):
        bound = 1.0 / jnp.sqrt(fan_in)
        return jax.random.uniform(k, shape, jnp.float32, -bound, bound)

    ks = jax.random.split(key, 10)
    return {
        "conv1_w": uni(ks[0], (6, 1, 5, 5), 1 * 5 * 5),
        "conv1_b": uni(ks[1], (6,), 1 * 5 * 5),
        "conv2_w": uni(ks[2], (16, 6, 5, 5), 6 * 5 * 5),
        "conv2_b": uni(ks[3], (16,), 6 * 5 * 5),
        "conv3_w": uni(ks[4], (120, 16, 5, 5), 16 * 5 * 5),
        "conv3_b": uni(ks[5], (120,), 16 * 5 * 5),
        "fc1_w": uni(ks[6], (84, 120), 120),
        "fc1_b": uni(ks[7], (84,), 120),
        "fc2_w": uni(ks[8], (10, 84), 84),
        "fc2_b": uni(ks[9], (10,), 84),
    }


def _ref_forward(params, x):
    def conv(x, w, b, pad):
        y = jax.lax.conv_general_dilated(
            x, w, (1, 1), [(pad, pad), (pad, pad)],
            dimension_numbers=("NCHW", "OIHW", "NCHW"))
        return y + b[None, :, None, None]

    def pool(x):
        B, C, H, W = x.shape
        return x.reshape(B, C, H // 2, 2, W // 2, 2).mean(axis=(3, 5))

    x = jnp.tanh(conv(x, params["conv1_w"], params["conv1_b"], 2)); x = pool(x)
    x = jnp.tanh(conv(x, params["conv2_w"], params["conv2_b"], 0)); x = pool(x)
    x = jnp.tanh(conv(x, params["conv3_w"], params["conv3_b"], 0))
    x = x.reshape(x.shape[0], -1)
    x = jnp.tanh(x @ params["fc1_w"].T + params["fc1_b"])
    x = x @ params["fc2_w"].T + params["fc2_b"]
    return jax.nn.log_softmax(x, axis=1)


if __name__ == "__main__":
    key = jax.random.PRNGKey(0)
    kx, kp = jax.random.split(key)
    # LeNet5 with fc1(in=120) implies 28x28 single-channel inputs.
    x = jax.random.normal(kx, (2, 1, 28, 28), jnp.float32)
    params = init_params(kp)
    ops = preprocess_params(params)          # one-time weight preprocessing

    fwd = jax.jit(lenet5_forward)
    out = jax.block_until_ready(fwd(ops, x))
    assert out.shape == (2, 10)

    ref = _ref_forward(params, x)
    # Tolerance sized for default-precision MXU (bf16 passes) + EUP tanh vs
    # the XLA f32 reference; any structural/layout bug would be orders of
    # magnitude larger than this.
    err = float(jnp.max(jnp.abs(out - ref)))
    assert err < 1e-2, f"max abs error vs reference: {err}"

    print("KERNEL_OK")
</pallas_src>

<mosaic_0001>
module attributes {stable_mosaic.version = 11 : i64} {
  func.func @_lenet5_kernel(%arg0: i32, %arg1: memref<2x32x32xf32, #tpu.memory_space<vmem>>, %arg2: memref<160x168xf32, #tpu.memory_space<vmem>>, %arg3: memref<1x168xf32, #tpu.memory_space<vmem>>, %arg4: memref<14x28xf32, #tpu.memory_space<vmem>>, %arg5: memref<168x84xf32, #tpu.memory_space<vmem>>, %arg6: memref<420x160xf32, #tpu.memory_space<vmem>>, %arg7: memref<1x160xf32, #tpu.memory_space<vmem>>, %arg8: memref<5x10xf32, #tpu.memory_space<vmem>>, %arg9: memref<160x80xf32, #tpu.memory_space<vmem>>, %arg10: memref<400x120xf32, #tpu.memory_space<vmem>>, %arg11: memref<1x120xf32, #tpu.memory_space<vmem>>, %arg12: memref<120x84xf32, #tpu.memory_space<vmem>>, %arg13: memref<1x84xf32, #tpu.memory_space<vmem>>, %arg14: memref<84x10xf32, #tpu.memory_space<vmem>>, %arg15: memref<1x10xf32, #tpu.memory_space<vmem>>, %arg16: memref<2x10xf32, #tpu.memory_space<vmem>>) attributes {dimension_semantics = [#tpu.dimension_semantics<parallel>], iteration_bounds = array<i64: 1>, scalar_prefetch = 0 : i64, scratch_operands = 0 : i64, tpu.core_type = #tpu.core_type<tc>, window_params = [{transform_indices = @transform_0, window_bounds = array<i64: 2, 32, 32>}, {pipeline_mode = #tpu.pipeline_mode<synchronous>, transform_indices = @transform_1, window_bounds = array<i64: 160, 168>}, {pipeline_mode = #tpu.pipeline_mode<synchronous>, transform_indices = @transform_2, window_bounds = array<i64: 1, 168>}, {pipeline_mode = #tpu.pipeline_mode<synchronous>, transform_indices = @transform_3, window_bounds = array<i64: 14, 28>}, {pipeline_mode = #tpu.pipeline_mode<synchronous>, transform_indices = @transform_4, window_bounds = array<i64: 168, 84>}, {pipeline_mode = #tpu.pipeline_mode<synchronous>, transform_indices = @transform_5, window_bounds = array<i64: 420, 160>}, {pipeline_mode = #tpu.pipeline_mode<synchronous>, transform_indices = @transform_6, window_bounds = array<i64: 1, 160>}, {pipeline_mode = #tpu.pipeline_mode<synchronous>, transform_indices = @transform_7, window_bounds = array<i64: 5, 10>}, {pipeline_mode = #tpu.pipeline_mode<synchronous>, transform_indices = @transform_8, window_bounds = array<i64: 160, 80>}, {pipeline_mode = #tpu.pipeline_mode<synchronous>, transform_indices = @transform_9, window_bounds = array<i64: 400, 120>}, {pipeline_mode = #tpu.pipeline_mode<synchronous>, transform_indices = @transform_10, window_bounds = array<i64: 1, 120>}, {pipeline_mode = #tpu.pipeline_mode<synchronous>, transform_indices = @transform_11, window_bounds = array<i64: 120, 84>}, {pipeline_mode = #tpu.pipeline_mode<synchronous>, transform_indices = @transform_12, window_bounds = array<i64: 1, 84>}, {pipeline_mode = #tpu.pipeline_mode<synchronous>, transform_indices = @transform_13, window_bounds = array<i64: 84, 10>}, {pipeline_mode = #tpu.pipeline_mode<synchronous>, transform_indices = @transform_14, window_bounds = array<i64: 1, 10>}, {transform_indices = @transform_15, window_bounds = array<i64: 2, 10>}]} {
    %c0 = arith.constant 0 : index
    %c0_0 = arith.constant 0 : index
    %c0_1 = arith.constant 0 : index
    %0 = vector.load %arg1[%c0, %c0_0, %c0_1] : memref<2x32x32xf32, #tpu.memory_space<vmem>>, vector<2x32x32xf32>
    %1 = vector.extract_strided_slice %0 {offsets = [0, 0, 0], sizes = [2, 28, 32], strides = [1, 1, 1]} : vector<2x32x32xf32> to vector<2x28x32xf32>
    %2 = vector.extract_strided_slice %0 {offsets = [0, 1, 0], sizes = [2, 28, 32], strides = [1, 1, 1]} : vector<2x32x32xf32> to vector<2x28x32xf32>
    %3 = vector.extract_strided_slice %0 {offsets = [0, 2, 0], sizes = [2, 28, 32], strides = [1, 1, 1]} : vector<2x32x32xf32> to vector<2x28x32xf32>
    %4 = vector.extract_strided_slice %0 {offsets = [0, 3, 0], sizes = [2, 28, 32], strides = [1, 1, 1]} : vector<2x32x32xf32> to vector<2x28x32xf32>
    %5 = vector.extract_strided_slice %0 {offsets = [0, 4, 0], sizes = [2, 28, 32], strides = [1, 1, 1]} : vector<2x32x32xf32> to vector<2x28x32xf32>
    %6 = tpu.concatenate %1, %2, %3, %4, %5 in 2 : vector<2x28x32xf32>, vector<2x28x32xf32>, vector<2x28x32xf32>, vector<2x28x32xf32>, vector<2x28x32xf32> -> vector<2x28x160xf32>
    %7 = vector.shape_cast %6 : vector<2x28x160xf32> to vector<56x160xf32>
    %c0_2 = arith.constant 0 : index
    %c0_3 = arith.constant 0 : index
    %8 = vector.load %arg2[%c0_2, %c0_3] : memref<160x168xf32, #tpu.memory_space<vmem>>, vector<160x168xf32>
    %cst = arith.constant dense<0.000000e+00> : vector<56x168xf32>
    %9 = tpu.matmul %7, %8, %cst {dimension_numbers = #tpu.dot_dimension_numbers<[1], [0], [0], [1], [0, 0, 1, 1], [], []>} : vector<56x160xf32>, vector<160x168xf32>, vector<56x168xf32> -> vector<56x168xf32>
    %c0_4 = arith.constant 0 : index
    %c0_5 = arith.constant 0 : index
    %10 = vector.load %arg3[%c0_4, %c0_5] : memref<1x168xf32, #tpu.memory_space<vmem>>, vector<1x168xf32>
    %11 = vector.broadcast %10 : vector<1x168xf32> to vector<56x168xf32>
    %12 = arith.addf %9, %11 : vector<56x168xf32>
    %13 = math.tanh %12 : vector<56x168xf32>
    %c0_6 = arith.constant 0 : index
    %c0_7 = arith.constant 0 : index
    %14 = vector.load %arg5[%c0_6, %c0_7] : memref<168x84xf32, #tpu.memory_space<vmem>>, vector<168x84xf32>
    %cst_8 = arith.constant dense<0.000000e+00> : vector<56x84xf32>
    %15 = tpu.matmul %13, %14, %cst_8 {dimension_numbers = #tpu.dot_dimension_numbers<[1], [0], [0], [1], [0, 0, 1, 1], [], []>} : vector<56x168xf32>, vector<168x84xf32>, vector<56x84xf32> -> vector<56x84xf32>
    %16 = vector.shape_cast %15 : vector<56x84xf32> to vector<2x28x84xf32>
    %c0_9 = arith.constant 0 : index
    %c0_10 = arith.constant 0 : index
    %17 = vector.load %arg4[%c0_9, %c0_10] : memref<14x28xf32, #tpu.memory_space<vmem>>, vector<14x28xf32>
    %18 = vector.shape_cast %17 : vector<14x28xf32> to vector<1x14x28xf32>
    %19 = vector.broadcast %18 : vector<1x14x28xf32> to vector<2x14x28xf32>
    %cst_11 = arith.constant dense<0.000000e+00> : vector<2x14x84xf32>
    %20 = tpu.matmul %19, %16, %cst_11 {dimension_numbers = #tpu.dot_dimension_numbers<[2], [1], [1], [2], [0, 0, 0, 1, 1, 2], [0], [0]>} : vector<2x14x28xf32>, vector<2x28x84xf32>, vector<2x14x84xf32> -> vector<2x14x84xf32>
    %21 = vector.extract_strided_slice %20 {offsets = [0, 0, 0], sizes = [2, 10, 84], strides = [1, 1, 1]} : vector<2x14x84xf32> to vector<2x10x84xf32>
    %22 = vector.extract_strided_slice %20 {offsets = [0, 1, 0], sizes = [2, 10, 84], strides = [1, 1, 1]} : vector<2x14x84xf32> to vector<2x10x84xf32>
    %23 = vector.extract_strided_slice %20 {offsets = [0, 2, 0], sizes = [2, 10, 84], strides = [1, 1, 1]} : vector<2x14x84xf32> to vector<2x10x84xf32>
    %24 = vector.extract_strided_slice %20 {offsets = [0, 3, 0], sizes = [2, 10, 84], strides = [1, 1, 1]} : vector<2x14x84xf32> to vector<2x10x84xf32>
    %25 = vector.extract_strided_slice %20 {offsets = [0, 4, 0], sizes = [2, 10, 84], strides = [1, 1, 1]} : vector<2x14x84xf32> to vector<2x10x84xf32>
    %26 = tpu.concatenate %21, %22, %23, %24, %25 in 2 : vector<2x10x84xf32>, vector<2x10x84xf32>, vector<2x10x84xf32>, vector<2x10x84xf32>, vector<2x10x84xf32> -> vector<2x10x420xf32>
    %27 = vector.shape_cast %26 : vector<2x10x420xf32> to vector<20x420xf32>
    %c0_12 = arith.constant 0 : index
    %c0_13 = arith.constant 0 : index
    %28 = vector.load %arg6[%c0_12, %c0_13] : memref<420x160xf32, #tpu.memory_space<vmem>>, vector<420x160xf32>
    %cst_14 = arith.constant dense<0.000000e+00> : vector<20x160xf32>
    %29 = tpu.matmul %27, %28, %cst_14 {dimension_numbers = #tpu.dot_dimension_numbers<[1], [0], [0], [1], [0, 0, 1, 1], [], []>} : vector<20x420xf32>, vector<420x160xf32>, vector<20x160xf32> -> vector<20x160xf32>
    %c0_15 = arith.constant 0 : index
    %c0_16 = arith.constant 0 : index
    %30 = vector.load %arg7[%c0_15, %c0_16] : memref<1x160xf32, #tpu.memory_space<vmem>>, vector<1x160xf32>
    %31 = vector.broadcast %30 : vector<1x160xf32> to vector<20x160xf32>
    %32 = arith.addf %29, %31 : vector<20x160xf32>
    %33 = math.tanh %32 : vector<20x160xf32>
    %c0_17 = arith.constant 0 : index
    %c0_18 = arith.constant 0 : index
    %34 = vector.load %arg9[%c0_17, %c0_18] : memref<160x80xf32, #tpu.memory_space<vmem>>, vector<160x80xf32>
    %cst_19 = arith.constant dense<0.000000e+00> : vector<20x80xf32>
    %35 = tpu.matmul %33, %34, %cst_19 {dimension_numbers = #tpu.dot_dimension_numbers<[1], [0], [0], [1], [0, 0, 1, 1], [], []>} : vector<20x160xf32>, vector<160x80xf32>, vector<20x80xf32> -> vector<20x80xf32>
    %36 = vector.shape_cast %35 : vector<20x80xf32> to vector<2x10x80xf32>
    %c0_20 = arith.constant 0 : index
    %c0_21 = arith.constant 0 : index
    %37 = vector.load %arg8[%c0_20, %c0_21] : memref<5x10xf32, #tpu.memory_space<vmem>>, vector<5x10xf32>
    %38 = vector.shape_cast %37 : vector<5x10xf32> to vector<1x5x10xf32>
    %39 = vector.broadcast %38 : vector<1x5x10xf32> to vector<2x5x10xf32>
    %cst_22 = arith.constant dense<0.000000e+00> : vector<2x5x80xf32>
    %40 = tpu.matmul %39, %36, %cst_22 {dimension_numbers = #tpu.dot_dimension_numbers<[2], [1], [1], [2], [0, 0, 0, 1, 1, 2], [0], [0]>} : vector<2x5x10xf32>, vector<2x10x80xf32>, vector<2x5x80xf32> -> vector<2x5x80xf32>
    %41 = vector.extract_strided_slice %40 {offsets = [0, 0, 0], sizes = [2, 1, 80], strides = [1, 1, 1]} : vector<2x5x80xf32> to vector<2x1x80xf32>
    %42 = vector.extract_strided_slice %40 {offsets = [0, 1, 0], sizes = [2, 1, 80], strides = [1, 1, 1]} : vector<2x5x80xf32> to vector<2x1x80xf32>
    %43 = vector.extract_strided_slice %40 {offsets = [0, 2, 0], sizes = [2, 1, 80], strides = [1, 1, 1]} : vector<2x5x80xf32> to vector<2x1x80xf32>
    %44 = vector.extract_strided_slice %40 {offsets = [0, 3, 0], sizes = [2, 1, 80], strides = [1, 1, 1]} : vector<2x5x80xf32> to vector<2x1x80xf32>
    %45 = vector.extract_strided_slice %40 {offsets = [0, 4, 0], sizes = [2, 1, 80], strides = [1, 1, 1]} : vector<2x5x80xf32> to vector<2x1x80xf32>
    %46 = tpu.concatenate %41, %42, %43, %44, %45 in 2 : vector<2x1x80xf32>, vector<2x1x80xf32>, vector<2x1x80xf32>, vector<2x1x80xf32>, vector<2x1x80xf32> -> vector<2x1x400xf32>
    %47 = vector.shape_cast %46 : vector<2x1x400xf32> to vector<2x400xf32>
    %c0_23 = arith.constant 0 : index
    %c0_24 = arith.constant 0 : index
    %48 = vector.load %arg10[%c0_23, %c0_24] : memref<400x120xf32, #tpu.memory_space<vmem>>, vector<400x120xf32>
    %cst_25 = arith.constant dense<0.000000e+00> : vector<2x120xf32>
    %49 = tpu.matmul %47, %48, %cst_25 {dimension_numbers = #tpu.dot_dimension_numbers<[1], [0], [0], [1], [0, 0, 1, 1], [], []>} : vector<2x400xf32>, vector<400x120xf32>, vector<2x120xf32> -> vector<2x120xf32>
    %c0_26 = arith.constant 0 : index
    %c0_27 = arith.constant 0 : index
    %50 = vector.load %arg11[%c0_26, %c0_27] : memref<1x120xf32, #tpu.memory_space<vmem>>, vector<1x120xf32>
    %51 = vector.broadcast %50 : vector<1x120xf32> to vector<2x120xf32>
    %52 = arith.addf %49, %51 : vector<2x120xf32>
    %53 = math.tanh %52 : vector<2x120xf32>
    %c0_28 = arith.constant 0 : index
    %c0_29 = arith.constant 0 : index
    %54 = vector.load %arg12[%c0_28, %c0_29] : memref<120x84xf32, #tpu.memory_space<vmem>>, vector<120x84xf32>
    %cst_30 = arith.constant dense<0.000000e+00> : vector<2x84xf32>
    %55 = tpu.matmul %53, %54, %cst_30 {dimension_numbers = #tpu.dot_dimension_numbers<[1], [0], [0], [1], [0, 0, 1, 1], [], []>} : vector<2x120xf32>, vector<120x84xf32>, vector<2x84xf32> -> vector<2x84xf32>
    %c0_31 = arith.constant 0 : index
    %c0_32 = arith.constant 0 : index
    %56 = vector.load %arg13[%c0_31, %c0_32] : memref<1x84xf32, #tpu.memory_space<vmem>>, vector<1x84xf32>
    %57 = vector.broadcast %56 : vector<1x84xf32> to vector<2x84xf32>
    %58 = arith.addf %55, %57 : vector<2x84xf32>
    %59 = math.tanh %58 : vector<2x84xf32>
    %c0_33 = arith.constant 0 : index
    %c0_34 = arith.constant 0 : index
    %60 = vector.load %arg14[%c0_33, %c0_34] : memref<84x10xf32, #tpu.memory_space<vmem>>, vector<84x10xf32>
    %cst_35 = arith.constant dense<0.000000e+00> : vector<2x10xf32>
    %61 = tpu.matmul %59, %60, %cst_35 {dimension_numbers = #tpu.dot_dimension_numbers<[1], [0], [0], [1], [0, 0, 1, 1], [], []>} : vector<2x84xf32>, vector<84x10xf32>, vector<2x10xf32> -> vector<2x10xf32>
    %c0_36 = arith.constant 0 : index
    %c0_37 = arith.constant 0 : index
    %62 = vector.load %arg15[%c0_36, %c0_37] : memref<1x10xf32, #tpu.memory_space<vmem>>, vector<1x10xf32>
    %63 = vector.broadcast %62 : vector<1x10xf32> to vector<2x10xf32>
    %64 = arith.addf %61, %63 : vector<2x10xf32>
    %cst_38 = arith.constant dense<0xFF800000> : vector<2xf32>
    %65 = vector.multi_reduction <maximumf>, %64, %cst_38 [1] : vector<2x10xf32> to vector<2xf32>
    %66 = vector.shape_cast %65 : vector<2xf32> to vector<2x1xf32>
    %67 = vector.broadcast %66 : vector<2x1xf32> to vector<2x10xf32>
    %68 = arith.subf %64, %67 : vector<2x10xf32>
    %69 = math.exp %68 : vector<2x10xf32>
    %cst_39 = arith.constant dense<0.000000e+00> : vector<2xf32>
    %70 = vector.multi_reduction <add>, %69, %cst_39 [1] : vector<2x10xf32> to vector<2xf32>
    %71 = vector.shape_cast %70 : vector<2xf32> to vector<2x1xf32>
    %72 = math.log %71 : vector<2x1xf32>
    %73 = vector.broadcast %72 : vector<2x1xf32> to vector<2x10xf32>
    %74 = arith.subf %68, %73 : vector<2x10xf32>
    %c0_40 = arith.constant 0 : index
    %c0_41 = arith.constant 0 : index
    %75 = vector.load %arg16[%c0_40, %c0_41] : memref<2x10xf32, #tpu.memory_space<vmem>>, vector<2x10xf32>
    tpu.vector_store %arg16[%c0_40, %c0_41], %74 {strides = array<i32>} : memref<2x10xf32, #tpu.memory_space<vmem>>, vector<2x10xf32>,
    return
  }
  func.func @transform_0(%arg0: i32) -> (i32, i32, i32) {
    %c0_i32 = arith.constant 0 : i32
    %c0_i32_0 = arith.constant 0 : i32
    %c0_i32_1 = arith.constant 0 : i32
    return %arg0, %c0_i32, %c0_i32_0 : i32, i32, i32
  }
  func.func @transform_1(%arg0: i32) -> (i32, i32) {
    %c0_i32 = arith.constant 0 : i32
    %c0_i32_0 = arith.constant 0 : i32
    %c0_i32_1 = arith.constant 0 : i32
    return %c0_i32, %c0_i32_0 : i32, i32
  }
  func.func @transform_2(%arg0: i32) -> (i32, i32) {
    %c0_i32 = arith.constant 0 : i32
    %c0_i32_0 = arith.constant 0 : i32
    %c0_i32_1 = arith.constant 0 : i32
    return %c0_i32, %c0_i32_0 : i32, i32
  }
  func.func @transform_3(%arg0: i32) -> (i32, i32) {
    %c0_i32 = arith.constant 0 : i32
    %c0_i32_0 = arith.constant 0 : i32
    %c0_i32_1 = arith.constant 0 : i32
    return %c0_i32, %c0_i32_0 : i32, i32
  }
  func.func @transform_4(%arg0: i32) -> (i32, i32) {
    %c0_i32 = arith.constant 0 : i32
    %c0_i32_0 = arith.constant 0 : i32
    %c0_i32_1 = arith.constant 0 : i32
    return %c0_i32, %c0_i32_0 : i32, i32
  }
  func.func @transform_5(%arg0: i32) -> (i32, i32) {
    %c0_i32 = arith.constant 0 : i32
    %c0_i32_0 = arith.constant 0 : i32
    %c0_i32_1 = arith.constant 0 : i32
    return %c0_i32, %c0_i32_0 : i32, i32
  }
  func.func @transform_6(%arg0: i32) -> (i32, i32) {
    %c0_i32 = arith.constant 0 : i32
    %c0_i32_0 = arith.constant 0 : i32
    %c0_i32_1 = arith.constant 0 : i32
    return %c0_i32, %c0_i32_0 : i32, i32
  }
  func.func @transform_7(%arg0: i32) -> (i32, i32) {
    %c0_i32 = arith.constant 0 : i32
    %c0_i32_0 = arith.constant 0 : i32
    %c0_i32_1 = arith.constant 0 : i32
    return %c0_i32, %c0_i32_0 : i32, i32
  }
  func.func @transform_8(%arg0: i32) -> (i32, i32) {
    %c0_i32 = arith.constant 0 : i32
    %c0_i32_0 = arith.constant 0 : i32
    %c0_i32_1 = arith.constant 0 : i32
    return %c0_i32, %c0_i32_0 : i32, i32
  }
  func.func @transform_9(%arg0: i32) -> (i32, i32) {
    %c0_i32 = arith.constant 0 : i32
    %c0_i32_0 = arith.constant 0 : i32
    %c0_i32_1 = arith.constant 0 : i32
    return %c0_i32, %c0_i32_0 : i32, i32
  }
  func.func @transform_10(%arg0: i32) -> (i32, i32) {
    %c0_i32 = arith.constant 0 : i32
    %c0_i32_0 = arith.constant 0 : i32
    %c0_i32_1 = arith.constant 0 : i32
    return %c0_i32, %c0_i32_0 : i32, i32
  }
  func.func @transform_11(%arg0: i32) -> (i32, i32) {
    %c0_i32 = arith.constant 0 : i32
    %c0_i32_0 = arith.constant 0 : i32
    %c0_i32_1 = arith.constant 0 : i32
    return %c0_i32, %c0_i32_0 : i32, i32
  }
  func.func @transform_12(%arg0: i32) -> (i32, i32) {
    %c0_i32 = arith.constant 0 : i32
    %c0_i32_0 = arith.constant 0 : i32
    %c0_i32_1 = arith.constant 0 : i32
    return %c0_i32, %c0_i32_0 : i32, i32
  }
  func.func @transform_13(%arg0: i32) -> (i32, i32) {
    %c0_i32 = arith.constant 0 : i32
    %c0_i32_0 = arith.constant 0 : i32
    %c0_i32_1 = arith.constant 0 : i32
    return %c0_i32, %c0_i32_0 : i32, i32
  }
  func.func @transform_14(%arg0: i32) -> (i32, i32) {
    %c0_i32 = arith.constant 0 : i32
    %c0_i32_0 = arith.constant 0 : i32
    %c0_i32_1 = arith.constant 0 : i32
    return %c0_i32, %c0_i32_0 : i32, i32
  }
  func.func @transform_15(%arg0: i32) -> (i32, i32) {
    %c0_i32 = arith.constant 0 : i32
    %c0_i32_0 = arith.constant 0 : i32
    return %arg0, %c0_i32 : i32, i32
  }
}

</mosaic_0001>

<llo_original>
// kernel: lenet5_forward.1
$region0: #{lenet5_forward.1}
  #allocation0 [shape = 'u32[]', space=smem, size = 0x4, offset = 0x4, fixed_abs, tag = 'smem constant byte address 0x4 - core index']
  #allocation1 [shape = 'u32[144,128]{1,0:T(1,128)}', space=vmem, size = 0x12000, scoped, tag = 'internal scratch']
  %s0 = inlined_call_operand.vmem [shape: f32[2,32,32], index: 0, kind: input, shape index: {}]
  %s1 = inlined_call_operand.vmem [shape: f32[160,168], index: 1, kind: input, shape index: {}]
  %s2 = inlined_call_operand.vmem [shape: f32[1,168], index: 2, kind: input, shape index: {}]
  %s3 = inlined_call_operand.vmem [shape: f32[14,28], index: 3, kind: input, shape index: {}]
  %s4 = inlined_call_operand.vmem [shape: f32[168,84], index: 4, kind: input, shape index: {}]
  %s5 = inlined_call_operand.vmem [shape: f32[420,160], index: 5, kind: input, shape index: {}]
  %s6 = inlined_call_operand.vmem [shape: f32[1,160], index: 6, kind: input, shape index: {}]
  %s7 = inlined_call_operand.vmem [shape: f32[5,10], index: 7, kind: input, shape index: {}]
  %s8 = inlined_call_operand.vmem [shape: f32[160,80], index: 8, kind: input, shape index: {}]
  %s9 = inlined_call_operand.vmem [shape: f32[400,120], index: 9, kind: input, shape index: {}]
  %s10 = inlined_call_operand.vmem [shape: f32[1,120], index: 10, kind: input, shape index: {}]
  %s11 = inlined_call_operand.vmem [shape: f32[120,84], index: 11, kind: input, shape index: {}]
  %s12 = inlined_call_operand.vmem [shape: f32[1,84], index: 12, kind: input, shape index: {}]
  %s13 = inlined_call_operand.vmem [shape: f32[84,10], index: 13, kind: input, shape index: {}]
  %s14 = inlined_call_operand.vmem [shape: f32[1,10], index: 14, kind: input, shape index: {}]
  %s15 = inlined_call_operand.hbm [shape: f32[2,10], index: 15, kind: output, shape index: {}]
  %s16 = sld [smem:[#allocation0]]
  $region70: #{lenet5_forward.1} parent=0
    _
  %s18 = ssub.s32 1, %s16
  %s19 = scalar_select 0, %s18, %s16
  $region1: #{lenet5_forward.1} parent=0
    #allocation2 [shape = 'u8[1024]{0}', space=vmem, size = 0x400, scoped, tag = 'output window, operand 0, single buffered']
    #allocation3 [shape = 's32[1]{0}', space=sflag, size = 0x4, scoped, tag = 'scoped memory for lenet5_forward.1']
    %20 = vsyncpa [#allocation3], 0
    // Predicated region
    $region2: #{lenet5_forward.1} parent=1 // pred_check
      _
    $region3: #{lenet5_forward.1} parent=1 // pred_check_branch
      %22 = sbr.rel (0) target = $region5
    $region4: #{lenet5_forward.1} parent=1 // pred_region
      _
    $region5: #{lenet5_forward.1} parent=1 // pred_fallthru
      _
    // Predicated region
    $region6: #{lenet5_forward.1} parent=1 // pred_check
      _
    $region7: #{lenet5_forward.1} parent=1 // pred_check_branch
      %24 = sbr.rel (0) target = $region9
    $region8: #{lenet5_forward.1} parent=1 // pred_region
      _
    $region9: #{lenet5_forward.1} parent=1 // pred_fallthru
      _
    // Predicated region
    $region10: #{lenet5_forward.1} parent=1 // pred_check
      _
    $region11: #{lenet5_forward.1} parent=1 // pred_check_branch
      %26 = sbr.rel (0) target = $region13
    $region12: #{lenet5_forward.1} parent=1 // pred_region
      _
    $region13: #{lenet5_forward.1} parent=1 // pred_fallthru
      _
    // Predicated region
    $region14: #{lenet5_forward.1} parent=1 // pred_check
      _
    $region15: #{lenet5_forward.1} parent=1 // pred_check_branch
      %28 = sbr.rel (0) target = $region17
    $region16: #{lenet5_forward.1} parent=1 // pred_region
      _
    $region17: #{lenet5_forward.1} parent=1 // pred_fallthru
      _
    // Predicated region
    $region18: #{lenet5_forward.1} parent=1 // pred_check
      _
    $region19: #{lenet5_forward.1} parent=1 // pred_check_branch
      %30 = sbr.rel (0) target = $region21
    $region20: #{lenet5_forward.1} parent=1 // pred_region
      _
    $region21: #{lenet5_forward.1} parent=1 // pred_fallthru
      _
    // Predicated region
    $region22: #{lenet5_forward.1} parent=1 // pred_check
      _
    $region23: #{lenet5_forward.1} parent=1 // pred_check_branch
      %32 = sbr.rel (0) target = $region25
    $region24: #{lenet5_forward.1} parent=1 // pred_region
      _
    $region25: #{lenet5_forward.1} parent=1 // pred_fallthru
      _
    // Predicated region
    $region26: #{lenet5_forward.1} parent=1 // pred_check
      _
    $region27: #{lenet5_forward.1} parent=1 // pred_check_branch
      %34 = sbr.rel (0) target = $region29
    $region28: #{lenet5_forward.1} parent=1 // pred_region
      _
    $region29: #{lenet5_forward.1} parent=1 // pred_fallthru
      _
    // Predicated region
    $region30: #{lenet5_forward.1} parent=1 // pred_check
      _
    $region31: #{lenet5_forward.1} parent=1 // pred_check_branch
      %36 = sbr.rel (0) target = $region33
    $region32: #{lenet5_forward.1} parent=1 // pred_region
      _
    $region33: #{lenet5_forward.1} parent=1 // pred_fallthru
      _
    // Predicated region
    $region34: #{lenet5_forward.1} parent=1 // pred_check
      _
    $region35: #{lenet5_forward.1} parent=1 // pred_check_branch
      %38 = sbr.rel (0) target = $region37
    $region36: #{lenet5_forward.1} parent=1 // pred_region
      _
    $region37: #{lenet5_forward.1} parent=1 // pred_fallthru
      _
    // Predicated region
    $region38: #{lenet5_forward.1} parent=1 // pred_check
      _
    $region39: #{lenet5_forward.1} parent=1 // pred_check_branch
      %40 = sbr.rel (0) target = $region41
    $region40: #{lenet5_forward.1} parent=1 // pred_region
      _
    $region41: #{lenet5_forward.1} parent=1 // pred_fallthru
      _
    // Predicated region
    $region42: #{lenet5_forward.1} parent=1 // pred_check
      _
    $region43: #{lenet5_forward.1} parent=1 // pred_check_branch
      %42 = sbr.rel (0) target = $region45
    $region44: #{lenet5_forward.1} parent=1 // pred_region
      _
    $region45: #{lenet5_forward.1} parent=1 // pred_fallthru
      _
    // Predicated region
    $region46: #{lenet5_forward.1} parent=1 // pred_check
      _
    $region47: #{lenet5_forward.1} parent=1 // pred_check_branch
      %44 = sbr.rel (0) target = $region49
    $region48: #{lenet5_forward.1} parent=1 // pred_region
      _
    $region49: #{lenet5_forward.1} parent=1 // pred_fallthru
      _
    // Predicated region
    $region50: #{lenet5_forward.1} parent=1 // pred_check
      _
    $region51: #{lenet5_forward.1} parent=1 // pred_check_branch
      %46 = sbr.rel (0) target = $region53
    $region52: #{lenet5_forward.1} parent=1 // pred_region
      _
    $region53: #{lenet5_forward.1} parent=1 // pred_fallthru
      _
    // Predicated region
    $region54: #{lenet5_forward.1} parent=1 // pred_check
      _
    $region55: #{lenet5_forward.1} parent=1 // pred_check_branch
      %48 = sbr.rel (0) target = $region57
    $region56: #{lenet5_forward.1} parent=1 // pred_region
      _
    $region57: #{lenet5_forward.1} parent=1 // pred_fallthru
      _
    // Predicated region
    $region58: #{lenet5_forward.1} parent=1 // pred_check
      _
    $region59: #{lenet5_forward.1} parent=1 // pred_check_branch
      %50 = sbr.rel (0) target = $region61
    $region60: #{lenet5_forward.1} parent=1 // pred_region
      _
    $region61: #{lenet5_forward.1} parent=1 // pred_fallthru
      _
    %v51 = vld [vmem:[%s0] sm:$0xff]
    %v52 = vld [vmem:[%s0 + $0x8] sm:$0xff]
    %v53 = vld [vmem:[%s0 + $0x10] sm:$0xff]
    %v54 = vld [vmem:[%s0 + $0x18] sm:$0xff]
    %v55 = vld [vmem:[%s0 + $0x20] sm:$0xff]
    %v56 = vld [vmem:[%s0 + $0x28] sm:$0xff]
    %v57 = vld [vmem:[%s0 + $0x30] sm:$0xff]
    %v58 = vld [vmem:[%s0 + $0x38] sm:$0xff]
    %vm67 = vcmask 1046528
    %v68 = vrot.slane %v51, 1
    %v69 = vrot.slane %v52, 1
    %v70 = vsel %vm67, %v68, %v69
    %v71 = vrot.slane %v53, 1
    %v72 = vsel %vm67, %v69, %v71
    %v73 = vrot.slane %v54, 1
    %v74 = vsel %vm67, %v71, %v73
    %v75 = vrot.slane %v55, 1
    %v76 = vrot.slane %v56, 1
    %v77 = vsel %vm67, %v75, %v76
    %v78 = vrot.slane %v57, 1
    %v79 = vsel %vm67, %v76, %v78
    %v80 = vrot.slane %v58, 1
    %v81 = vsel %vm67, %v78, %v80
    %82 = vrot.lane.b32.xlu0 %v70, 32
    %v83 = vpop.permute.xlu0 %82
    %84 = vrot.lane.b32.xlu0 %v72, 32
    %v85 = vpop.permute.xlu0 %84
    %86 = vrot.lane.b32.xlu0 %v74, 32
    %v87 = vpop.permute.xlu0 %86
    %88 = vrot.lane.b32.xlu0 %v73, 32
    %v89 = vpop.permute.xlu0 %88
    %90 = vrot.lane.b32.xlu0 %v77, 32
    %v91 = vpop.permute.xlu0 %90
    %92 = vrot.lane.b32.xlu0 %v79, 32
    %v93 = vpop.permute.xlu0 %92
    %94 = vrot.lane.b32.xlu0 %v81, 32
    %v95 = vpop.permute.xlu0 %94
    %96 = vrot.lane.b32.xlu0 %v80, 32
    %v97 = vpop.permute.xlu0 %96
    %vm106 = vcmask 1045504
    %v107 = vrot.slane %v51, 2
    %v108 = vrot.slane %v52, 2
    %v109 = vsel %vm106, %v107, %v108
    %v110 = vrot.slane %v53, 2
    %v111 = vsel %vm106, %v108, %v110
    %v112 = vrot.slane %v54, 2
    %v113 = vsel %vm106, %v110, %v112
    %v114 = vrot.slane %v55, 2
    %v115 = vrot.slane %v56, 2
    %v116 = vsel %vm106, %v114, %v115
    %v117 = vrot.slane %v57, 2
    %v118 = vsel %vm106, %v115, %v117
    %v119 = vrot.slane %v58, 2
    %v120 = vsel %vm106, %v117, %v119
    %121 = vrot.lane.b32.xlu0 %v109, 64
    %v122 = vpop.permute.xlu0 %121
    %123 = vrot.lane.b32.xlu0 %v111, 64
    %v124 = vpop.permute.xlu0 %123
    %125 = vrot.lane.b32.xlu0 %v113, 64
    %v126 = vpop.permute.xlu0 %125
    %127 = vrot.lane.b32.xlu0 %v112, 64
    %v128 = vpop.permute.xlu0 %127
    %129 = vrot.lane.b32.xlu0 %v116, 64
    %v130 = vpop.permute.xlu0 %129
    %131 = vrot.lane.b32.xlu0 %v118, 64
    %v132 = vpop.permute.xlu0 %131
    %133 = vrot.lane.b32.xlu0 %v120, 64
    %v134 = vpop.permute.xlu0 %133
    %135 = vrot.lane.b32.xlu0 %v119, 64
    %v136 = vpop.permute.xlu0 %135
    %vm145 = vcmask 1044480
    %v146 = vrot.slane %v51, 3
    %v147 = vrot.slane %v52, 3
    %v148 = vsel %vm145, %v146, %v147
    %v149 = vrot.slane %v53, 3
    %v150 = vsel %vm145, %v147, %v149
    %v151 = vrot.slane %v54, 3
    %v152 = vsel %vm145, %v149, %v151
    %v153 = vrot.slane %v55, 3
    %v154 = vrot.slane %v56, 3
    %v155 = vsel %vm145, %v153, %v154
    %v156 = vrot.slane %v57, 3
    %v157 = vsel %vm145, %v154, %v156
    %v158 = vrot.slane %v58, 3
    %v159 = vsel %vm145, %v156, %v158
    %160 = vrot.lane.b32.xlu0 %v148, 96
    %v161 = vpop.permute.xlu0 %160
    %162 = vrot.lane.b32.xlu0 %v150, 96
    %v163 = vpop.permute.xlu0 %162
    %164 = vrot.lane.b32.xlu0 %v152, 96
    %v165 = vpop.permute.xlu0 %164
    %166 = vrot.lane.b32.xlu0 %v151, 96
    %v167 = vpop.permute.xlu0 %166
    %168 = vrot.lane.b32.xlu0 %v155, 96
    %v169 = vpop.permute.xlu0 %168
    %170 = vrot.lane.b32.xlu0 %v157, 96
    %v171 = vpop.permute.xlu0 %170
    %172 = vrot.lane.b32.xlu0 %v159, 96
    %v173 = vpop.permute.xlu0 %172
    %174 = vrot.lane.b32.xlu0 %v158, 96
    %v175 = vpop.permute.xlu0 %174
    %vm184 = vcmask 1043456
    %v185 = vrot.slane %v51, 4
    %v186 = vrot.slane %v52, 4
    %v187 = vsel %vm184, %v185, %v186
    %v188 = vrot.slane %v53, 4
    %v189 = vsel %vm184, %v186, %v188
    %v190 = vrot.slane %v54, 4
    %v191 = vsel %vm184, %v188, %v190
    %v192 = vrot.slane %v55, 4
    %v193 = vrot.slane %v56, 4
    %v194 = vsel %vm184, %v192, %v193
    %v195 = vrot.slane %v57, 4
    %v196 = vsel %vm184, %v193, %v195
    %v197 = vrot.slane %v58, 4
    %v198 = vsel %vm184, %v195, %v197
    %vm199 = vcmask 261120
    %v200 = vsel %vm199, %v51, %v83
    %v201 = vsel %vm199, %v52, %v85
    %v202 = vsel %vm199, %v53, %v87
    %v203 = vsel %vm199, %v54, %v89
    %v204 = vsel %vm199, %v55, %v91
    %v205 = vsel %vm199, %v56, %v93
    %v206 = vsel %vm199, %v57, %v95
    %v207 = vsel %vm199, %v58, %v97
    %vm208 = vcmask 523264
    %v209 = vsel %vm208, %v200, %v122
    %v210 = vsel %vm208, %v201, %v124
    %v211 = vsel %vm208, %v202, %v126
    %v212 = vsel %vm208, %v203, %v128
    %v213 = vsel %vm208, %v204, %v130
    %v214 = vsel %vm208, %v205, %v132
    %v215 = vsel %vm208, %v206, %v134
    %v216 = vsel %vm208, %v207, %v136
    %vm217 = vcmask 785408
    %v218 = vsel %vm217, %v209, %v161
    %v219 = vsel %vm217, %v210, %v163
    %v220 = vsel %vm217, %v211, %v165
    %v221 = vsel %vm217, %v212, %v167
    %v222 = vsel %vm217, %v213, %v169
    %v223 = vsel %vm217, %v214, %v171
    %v224 = vsel %vm217, %v215, %v173
    %v225 = vsel %vm217, %v216, %v175
    %v234 = vcombine.low %v218, %v187
    %v235 = vcombine.high %v218, %v187
    %v236 = vcombine.low %v219, %v189
    %v237 = vcombine.high %v219, %v189
    %v238 = vcombine.low %v220, %v191
    %v239 = vcombine.high %v220, %v191
    %v240 = vcombine.low %v221, %v190
    %v241 = vcombine.low %v222, %v194
    %v242 = vcombine.high %v222, %v194
    %v243 = vcombine.low %v223, %v196
    %v244 = vcombine.high %v223, %v196
    %v245 = vcombine.low %v224, %v198
    %v246 = vcombine.high %v224, %v198
    %v247 = vcombine.low %v225, %v197
    %v248 = vld [vmem:[%s1] sm:$0xff]
    %v249 = vld [vmem:[%s1 + $0x8] sm:$0xff]
    %v250 = vld [vmem:[%s1 + $0x10] sm:$0xff]
    %v251 = vld [vmem:[%s1 + $0x18] sm:$0xff]
    %v252 = vld [vmem:[%s1 + $0x20] sm:$0xff]
    %v253 = vld [vmem:[%s1 + $0x28] sm:$0xff]
    %v254 = vld [vmem:[%s1 + $0x30] sm:$0xff]
    %v255 = vld [vmem:[%s1 + $0x38] sm:$0xff]
    %v256 = vld [vmem:[%s1 + $0x40] sm:$0xff]
    %v257 = vld [vmem:[%s1 + $0x48] sm:$0xff]
    %v258 = vld [vmem:[%s1 + $0x50] sm:$0xff]
    %v259 = vld [vmem:[%s1 + $0x58] sm:$0xff]
    %v260 = vld [vmem:[%s1 + $0x60] sm:$0xff]
    %v261 = vld [vmem:[%s1 + $0x68] sm:$0xff]
    %v262 = vld [vmem:[%s1 + $0x70] sm:$0xff]
    %v263 = vld [vmem:[%s1 + $0x78] sm:$0xff]
    %v264 = vld [vmem:[%s1 + $0x80] sm:$0xff]
    %v265 = vld [vmem:[%s1 + $0x88] sm:$0xff]
    %v266 = vld [vmem:[%s1 + $0x90] sm:$0xff]
    %v267 = vld [vmem:[%s1 + $0x98] sm:$0xff]
    %v268 = vld [vmem:[%s1 + $0xa0] sm:$0xff]
    %v269 = vld [vmem:[%s1 + $0xa8] sm:$0xff]
    %v270 = vld [vmem:[%s1 + $0xb0] sm:$0xff]
    %v271 = vld [vmem:[%s1 + $0xb8] sm:$0xff]
    %v272 = vld [vmem:[%s1 + $0xc0] sm:$0xff]
    %v273 = vld [vmem:[%s1 + $0xc8] sm:$0xff]
    %v274 = vld [vmem:[%s1 + $0xd0] sm:$0xff]
    %v275 = vld [vmem:[%s1 + $0xd8] sm:$0xff]
    %v276 = vld [vmem:[%s1 + $0xe0] sm:$0xff]
    %v277 = vld [vmem:[%s1 + $0xe8] sm:$0xff]
    %v278 = vld [vmem:[%s1 + $0xf0] sm:$0xff]
    %v279 = vld [vmem:[%s1 + $0xf8] sm:$0xff]
    %v280 = vld [vmem:[%s1 + $0x100] sm:$0xff]
    %v281 = vld [vmem:[%s1 + $0x108] sm:$0xff]
    %v282 = vld [vmem:[%s1 + $0x110] sm:$0xff]
    %v283 = vld [vmem:[%s1 + $0x118] sm:$0xff]
    %v284 = vld [vmem:[%s1 + $0x120] sm:$0xff]
    %v285 = vld [vmem:[%s1 + $0x128] sm:$0xff]
    %v286 = vld [vmem:[%s1 + $0x130] sm:$0xff]
    %v287 = vld [vmem:[%s1 + $0x138] sm:$0xff]
    %v288 = vld [vmem:[%s2] sm:$0x3]
    %v290 = vlaneseq
    %v291 = vshrl.u32 %v290, 7
    %v292 = vsub.s32 0, %v291
    %v293 = vrot.slane %v288, %v292
    %v294 = vlaneseq
    %v295 = vshrl.u32 %v294, 7
    %v296 = vsub.s32 1, %v295
    %v297 = vrot.slane %v288, %v296
    %v300 = vcombine.low %v234, %v235
    %v301 = vcombine.high %v234, %v235
    %v302 = vcombine.low %v236, %v237
    %v303 = vcombine.high %v236, %v237
    %v304 = vcombine.low %v238, %v239
    %v305 = vcombine.high %v238, %v239
    %v306 = vcombine.low %v240, %v241
    %v307 = vcombine.high %v240, %v241
    %v308 = vcombine.low %v242, %v243
    %v309 = vcombine.high %v242, %v243
    %v310 = vcombine.low %v244, %v245
    %v311 = vcombine.high %v244, %v245
    %v312 = vcombine.low %v246, %v247
    %v313 = vcombine.high %v246, %v247
    %v321 = vsel %vm199, %v301, 0
    %v323 = vsel %vm199, %v303, 0
    %v325 = vsel %vm199, %v305, 0
    %v327 = vsel %vm199, %v307, 0
    %v329 = vsel %vm199, %v309, 0
    %v331 = vsel %vm199, %v311, 0
    %v333 = vsel %vm199, %v313, 0
    %335 = vmatprep.subr.mxu0 %v279
    %336 = vmatpush1.msra.mxu0 %v278
    %337 = vmatprep.subr.mxu0 %v277
    %338 = vmatpush1.msra.mxu0 %v276
    %339 = vmatprep.subr.mxu0 %v275
    %340 = vmatpush1.msra.mxu0 %v274
    %341 = vmatprep.subr.mxu0 %v273
    %342 = vmatpush1.msra.mxu0 %v272
    %343 = vmatprep.subr.mxu0 %v271
    %344 = vmatpush1.msra.mxu0 %v270
    %345 = vmatprep.subr.mxu0 %v269
    %346 = vmatpush1.msra.mxu0 %v268
    %347 = vmatprep.subr.mxu0 %v267
    %348 = vmatpush1.msra.mxu0 %v266
    %349 = vmatprep.subr.mxu0 %v265
    %350 = vmatpush1.msra.mxu0 %v264
    %351 = vmatprep.subr.mxu0 %v263
    %352 = vmatpush1.msra.mxu0 %v262
    %353 = vmatprep.subr.mxu0 %v261
    %354 = vmatpush1.msra.mxu0 %v260
    %355 = vmatprep.subr.mxu0 %v259
    %356 = vmatpush1.msra.mxu0 %v258
    %357 = vmatprep.subr.mxu0 %v257
    %358 = vmatpush1.msra.mxu0 %v256
    %359 = vmatprep.subr.mxu0 %v255
    %360 = vmatpush1.msra.mxu0 %v254
    %361 = vmatprep.subr.mxu0 %v253
    %362 = vmatpush1.msra.mxu0 %v252
    %363 = vmatprep.subr.mxu0 %v251
    %364 = vmatpush1.msra.mxu0 %v250
    %365 = vmatprep.subr.mxu0 %v249
    %366 = vmatpush1.msra.mxu0 %v248
    %367 = vmatprep.subr.mxu0 0.0
    %368 = vmatpush2.msra.mxu0 0.0
    %369 = vmatprep.subr.mxu0 0.0
    %370 = vmatpush2.msra.mxu0 0.0
    %371 = vmatprep.subr.mxu0 0.0
    %372 = vmatpush2.msra.mxu0 0.0
    %373 = vmatprep.subr.mxu0 0.0
    %374 = vmatpush2.msra.mxu0 0.0
    %375 = vmatprep.subr.mxu0 0.0
    %376 = vmatpush2.msra.mxu0 0.0
    %377 = vmatprep.subr.mxu0 0.0
    %378 = vmatpush2.msra.mxu0 0.0
    %379 = vmatprep.subr.mxu0 0.0
    %380 = vmatpush2.msra.mxu0 0.0
    %381 = vmatprep.subr.mxu0 0.0
    %382 = vmatpush2.msra.mxu0 0.0
    %383 = vmatprep.subr.mxu0 0.0
    %384 = vmatpush2.msra.mxu0 0.0
    %385 = vmatprep.subr.mxu0 0.0
    %386 = vmatpush2.msra.mxu0 0.0
    %387 = vmatprep.subr.mxu0 0.0
    %388 = vmatpush2.msra.mxu0 0.0
    %389 = vmatprep.subr.mxu0 0.0
    %390 = vmatpush2.msra.mxu0 0.0
    %391 = vmatprep.subr.mxu0 %v287
    %392 = vmatpush2.msra.mxu0 %v286
    %393 = vmatprep.subr.mxu0 %v285
    %394 = vmatpush2.msra.mxu0 %v284
    %395 = vmatprep.subr.mxu0 %v283
    %396 = vmatpush2.msra.mxu0 %v282
    %397 = vmatprep.subr.mxu0 %v281
    %398 = vmatpush2.msra.mxu0 %v280
    %399 = vmatprep.mubr.f32.mxu0 %v321
    %400 = vmatmul.mubr.f32.gmra.mxu0 %v300
    %v401 = vpop.f32.mrf.mxu0
    %v402 = vadd.f32 %v293, %v401
    %v403 = vpop.f32.mrf.mxu0
    %v404 = vadd.f32 %v297, %v403
    %405 = vmatprep.mubr.f32.mxu0 %v323
    %406 = vmatmul.mubr.f32.gmra.mxu0 %v302
    %v407 = vpop.f32.mrf.mxu0
    %v408 = vadd.f32 %v293, %v407
    %v409 = vpop.f32.mrf.mxu0
    %v410 = vadd.f32 %v297, %v409
    %411 = vmatprep.mubr.f32.mxu0 %v325
    %412 = vmatmul.mubr.f32.gmra.mxu0 %v304
    %v413 = vpop.f32.mrf.mxu0
    %v414 = vadd.f32 %v293, %v413
    %v415 = vpop.f32.mrf.mxu0
    %v416 = vadd.f32 %v297, %v415
    %417 = vmatprep.mubr.f32.mxu0 %v327
    %418 = vmatmul.mubr.f32.gmra.mxu0 %v306
    %v419 = vpop.f32.mrf.mxu0
    %v420 = vadd.f32 %v293, %v419
    %v421 = vpop.f32.mrf.mxu0
    %v422 = vadd.f32 %v297, %v421
    %423 = vmatprep.mubr.f32.mxu0 %v329
    %424 = vmatmul.mubr.f32.gmra.mxu0 %v308
    %v425 = vpop.f32.mrf.mxu0
    %v426 = vadd.f32 %v293, %v425
    %v427 = vpop.f32.mrf.mxu0
    %v428 = vadd.f32 %v297, %v427
    %429 = vmatprep.mubr.f32.mxu0 %v331
    %430 = vmatmul.mubr.f32.gmra.mxu0 %v310
    %v431 = vpop.f32.mrf.mxu0
    %v432 = vadd.f32 %v293, %v431
    %v433 = vpop.f32.mrf.mxu0
    %v434 = vadd.f32 %v297, %v433
    %435 = vmatprep.mubr.f32.mxu0 %v333
    %436 = vmatmul.mubr.f32.gmra.mxu0 %v312
    %v437 = vpop.f32.mrf.mxu0
    %v438 = vadd.f32 %v293, %v437
    %v439 = vpop.f32.mrf.mxu0
    %v440 = vadd.f32 %v297, %v439
    %441 = vdwg.mxu0
    %v442 = vtanh.pop %v402
    %v443 = vtanh.pop %v404
    %v444 = vtanh.pop %v408
    %v445 = vtanh.pop %v410
    %v446 = vtanh.pop %v414
    %v447 = vtanh.pop %v416
    %v448 = vtanh.pop %v420
    %v449 = vtanh.pop %v422
    %v450 = vtanh.pop %v426
    %v451 = vtanh.pop %v428
    %v452 = vtanh.pop %v432
    %v453 = vtanh.pop %v434
    %v454 = vtanh.pop %v438
    %v455 = vtanh.pop %v440
    %v456 = vld [vmem:[%s4] sm:$0xff]
    %v457 = vld [vmem:[%s4 + $0x8] sm:$0xff]
    %v458 = vld [vmem:[%s4 + $0x10] sm:$0xff]
    %v459 = vld [vmem:[%s4 + $0x18] sm:$0xff]
    %v460 = vld [vmem:[%s4 + $0x20] sm:$0xff]
    %v461 = vld [vmem:[%s4 + $0x28] sm:$0xff]
    %v462 = vld [vmem:[%s4 + $0x30] sm:$0xff]
    %v463 = vld [vmem:[%s4 + $0x38] sm:$0xff]
    %v464 = vld [vmem:[%s4 + $0x40] sm:$0xff]
    %v465 = vld [vmem:[%s4 + $0x48] sm:$0xff]
    %v466 = vld [vmem:[%s4 + $0x50] sm:$0xff]
    %v467 = vld [vmem:[%s4 + $0x58] sm:$0xff]
    %v468 = vld [vmem:[%s4 + $0x60] sm:$0xff]
    %v469 = vld [vmem:[%s4 + $0x68] sm:$0xff]
    %v470 = vld [vmem:[%s4 + $0x70] sm:$0xff]
    %v471 = vld [vmem:[%s4 + $0x78] sm:$0xff]
    %v472 = vld [vmem:[%s4 + $0x80] sm:$0xff]
    %v473 = vld [vmem:[%s4 + $0x88] sm:$0xff]
    %v474 = vld [vmem:[%s4 + $0x90] sm:$0xff]
    %v475 = vld [vmem:[%s4 + $0x98] sm:$0xff]
    %v476 = vld [vmem:[%s4 + $0xa0] sm:$0xff]
    %vm477 = vcmask 326656
    %v479 = vsel %vm477, %v443, 0
    %v482 = vsel %vm477, %v445, 0
    %v485 = vsel %vm477, %v447, 0
    %v488 = vsel %vm477, %v449, 0
    %v491 = vsel %vm477, %v451, 0
    %v494 = vsel %vm477, %v453, 0
    %v497 = vsel %vm477, %v455, 0
    %499 = vmatprep.subr.mxu0 0.0
    %500 = vmatpush1.msra.mxu0 %v471
    %501 = vmatprep.subr.mxu0 0.0
    %502 = vmatpush1.msra.mxu0 %v470
    %503 = vmatprep.subr.mxu0 0.0
    %504 = vmatpush1.msra.mxu0 %v469
    %505 = vmatprep.subr.mxu0 0.0
    %506 = vmatpush1.msra.mxu0 %v468
    %507 = vmatprep.subr.mxu0 0.0
    %508 = vmatpush1.msra.mxu0 %v467
    %509 = vmatprep.subr.mxu0 0.0
    %510 = vmatpush1.msra.mxu0 %v466
    %511 = vmatprep.subr.mxu0 0.0
    %512 = vmatpush1.msra.mxu0 %v465
    %513 = vmatprep.subr.mxu0 0.0
    %514 = vmatpush1.msra.mxu0 %v464
    %515 = vmatprep.subr.mxu0 0.0
    %516 = vmatpush1.msra.mxu0 %v463
    %517 = vmatprep.subr.mxu0 0.0
    %518 = vmatpush1.msra.mxu0 %v462
    %519 = vmatprep.subr.mxu0 0.0
    %520 = vmatpush1.msra.mxu0 %v461
    %521 = vmatprep.subr.mxu0 0.0
    %522 = vmatpush1.msra.mxu0 %v460
    %523 = vmatprep.subr.mxu0 0.0
    %524 = vmatpush1.msra.mxu0 %v459
    %525 = vmatprep.subr.mxu0 0.0
    %526 = vmatpush1.msra.mxu0 %v458
    %527 = vmatprep.subr.mxu0 0.0
    %528 = vmatpush1.msra.mxu0 %v457
    %529 = vmatprep.subr.mxu0 0.0
    %530 = vmatpush1.msra.mxu0 %v456
    %531 = vmatprep.subr.mxu0 0.0
    %532 = vmatpush2.msra.mxu0 0.0
    %533 = vmatprep.subr.mxu0 0.0
    %534 = vmatpush2.msra.mxu0 0.0
    %535 = vmatprep.subr.mxu0 0.0
    %536 = vmatpush2.msra.mxu0 0.0
    %537 = vmatprep.subr.mxu0 0.0
    %538 = vmatpush2.msra.mxu0 0.0
    %539 = vmatprep.subr.mxu0 0.0
    %540 = vmatpush2.msra.mxu0 0.0
    %541 = vmatprep.subr.mxu0 0.0
    %542 = vmatpush2.msra.mxu0 0.0
    %543 = vmatprep.subr.mxu0 0.0
    %544 = vmatpush2.msra.mxu0 0.0
    %545 = vmatprep.subr.mxu0 0.0
    %546 = vmatpush2.msra.mxu0 0.0
    %547 = vmatprep.subr.mxu0 0.0
    %548 = vmatpush2.msra.mxu0 0.0
    %549 = vmatprep.subr.mxu0 0.0
    %550 = vmatpush2.msra.mxu0 0.0
    %551 = vmatprep.subr.mxu0 0.0
    %552 = vmatpush2.msra.mxu0 0.0
    %553 = vmatprep.subr.mxu0 0.0
    %554 = vmatpush2.msra.mxu0 %v476
    %555 = vmatprep.subr.mxu0 0.0
    %556 = vmatpush2.msra.mxu0 %v475
    %557 = vmatprep.subr.mxu0 0.0
    %558 = vmatpush2.msra.mxu0 %v474
    %559 = vmatprep.subr.mxu0 0.0
    %560 = vmatpush2.msra.mxu0 %v473
    %561 = vmatprep.subr.mxu0 0.0
    %562 = vmatpush2.msra.mxu0 %v472
    %563 = vmatprep.mubr.f32.mxu0 %v479
    %564 = vmatmul.mubr.f32.gmra.mxu0 %v442
    %v565 = vpop.f32.mrf.mxu0
    %v566 = vadd.f32 0.0, %v565
    %v567 = vpop.f32.mrf.mxu0
    %568 = vmatprep.mubr.f32.mxu0 %v482
    %569 = vmatmul.mubr.f32.gmra.mxu0 %v444
    %v570 = vpop.f32.mrf.mxu0
    %v571 = vadd.f32 0.0, %v570
    %v572 = vpop.f32.mrf.mxu0
    %573 = vmatprep.mubr.f32.mxu0 %v485
    %574 = vmatmul.mubr.f32.gmra.mxu0 %v446
    %v575 = vpop.f32.mrf.mxu0
    %v576 = vadd.f32 0.0, %v575
    %v577 = vpop.f32.mrf.mxu0
    %578 = vmatprep.mubr.f32.mxu0 %v488
    %579 = vmatmul.mubr.f32.gmra.mxu0 %v448
    %v580 = vpop.f32.mrf.mxu0
    %v581 = vadd.f32 0.0, %v580
    %v582 = vpop.f32.mrf.mxu0
    %583 = vmatprep.mubr.f32.mxu0 %v491
    %584 = vmatmul.mubr.f32.gmra.mxu0 %v450
    %v585 = vpop.f32.mrf.mxu0
    %v586 = vadd.f32 0.0, %v585
    %v587 = vpop.f32.mrf.mxu0
    %588 = vmatprep.mubr.f32.mxu0 %v494
    %589 = vmatmul.mubr.f32.gmra.mxu0 %v452
    %v590 = vpop.f32.mrf.mxu0
    %v591 = vadd.f32 0.0, %v590
    %v592 = vpop.f32.mrf.mxu0
    %593 = vmatprep.mubr.f32.mxu0 %v497
    %594 = vmatmul.mubr.f32.gmra.mxu0 %v454
    %v595 = vpop.f32.mrf.mxu0
    %v596 = vadd.f32 0.0, %v595
    %v597 = vpop.f32.mrf.mxu0
    %598 = vdwg.mxu0
    %v606 = vcombine.high %v566, %v566
    %v607 = vcombine.high %v571, %v571
    %v608 = vcombine.high %v576, %v576
    %v609 = vcombine.high %v581, %v581
    %v610 = vcombine.high %v586, %v586
    %v611 = vcombine.high %v591, %v591
    %v612 = vcombine.high %v596, %v596
    %v613 = vld [vmem:[%s3] sm:$0xff]
    %v614 = vld [vmem:[%s3 + $0x8] sm:$0x3f]
    %v615 = vcombine.low %v566, %v606
    %v616 = vcombine.low %v571, %v607
    %v617 = vcombine.low %v576, %v608
    %vm621 = vcmask 228352
    %v623 = vsel %vm621, %v613, 0
    %v626 = vsel %vm621, %v614, 0
    %v628 = vsel %vm184, %v581, 0
    %630 = vmatprep.subr.mxu0 0.0
    %631 = vmatpush1.msra.mxu0 0.0
    %632 = vmatprep.subr.mxu0 0.0
    %633 = vmatpush1.msra.mxu0 0.0
    %634 = vmatprep.subr.mxu0 0.0
    %635 = vmatpush1.msra.mxu0 0.0
    %636 = vmatprep.subr.mxu0 0.0
    %637 = vmatpush1.msra.mxu0 0.0
    %638 = vmatprep.subr.mxu0 0.0
    %639 = vmatpush1.msra.mxu0 0.0
    %640 = vmatprep.subr.mxu0 0.0
    %641 = vmatpush1.msra.mxu0 0.0
    %642 = vmatprep.subr.mxu0 0.0
    %643 = vmatpush1.msra.mxu0 0.0
    %644 = vmatprep.subr.mxu0 0.0
    %645 = vmatpush1.msra.mxu0 0.0
    %646 = vmatprep.subr.mxu0 0.0
    %647 = vmatpush1.msra.mxu0 0.0
    %648 = vmatprep.subr.mxu0 0.0
    %649 = vmatpush1.msra.mxu0 0.0
    %650 = vmatprep.subr.mxu0 0.0
    %651 = vmatpush1.msra.mxu0 0.0
    %652 = vmatprep.subr.mxu0 0.0
    %653 = vmatpush1.msra.mxu0 0.0
    %654 = vmatprep.subr.mxu0 0.0
    %655 = vmatpush1.msra.mxu0 %v628
    %656 = vmatprep.subr.mxu0 0.0
    %657 = vmatpush1.msra.mxu0 %v617
    %658 = vmatprep.subr.mxu0 0.0
    %659 = vmatpush1.msra.mxu0 %v616
    %660 = vmatprep.subr.mxu0 0.0
    %661 = vmatpush1.msra.mxu0 %v615
    %662 = vmatprep.subr.mxu0 0.0
    %663 = vmatpush2.msra.mxu0 0.0
    %664 = vmatprep.subr.mxu0 0.0
    %665 = vmatpush2.msra.mxu0 0.0
    %666 = vmatprep.subr.mxu0 0.0
    %667 = vmatpush2.msra.mxu0 0.0
    %668 = vmatprep.subr.mxu0 0.0
    %669 = vmatpush2.msra.mxu0 0.0
    %670 = vmatprep.subr.mxu0 0.0
    %671 = vmatpush2.msra.mxu0 0.0
    %672 = vmatprep.subr.mxu0 0.0
    %673 = vmatpush2.msra.mxu0 0.0
    %674 = vmatprep.subr.mxu0 0.0
    %675 = vmatpush2.msra.mxu0 0.0
    %676 = vmatprep.subr.mxu0 0.0
    %677 = vmatpush2.msra.mxu0 0.0
    %678 = vmatprep.subr.mxu0 0.0
    %679 = vmatpush2.msra.mxu0 0.0
    %680 = vmatprep.subr.mxu0 0.0
    %681 = vmatpush2.msra.mxu0 0.0
    %682 = vmatprep.subr.mxu0 0.0
    %683 = vmatpush2.msra.mxu0 0.0
    %684 = vmatprep.subr.mxu0 0.0
    %685 = vmatpush2.msra.mxu0 0.0
    %686 = vmatprep.subr.mxu0 0.0
    %687 = vmatpush2.msra.mxu0 0.0
    %688 = vmatprep.subr.mxu0 0.0
    %689 = vmatpush2.msra.mxu0 0.0
    %690 = vmatprep.subr.mxu0 0.0
    %691 = vmatpush2.msra.mxu0 0.0
    %692 = vmatprep.subr.mxu0 0.0
    %693 = vmatpush2.msra.mxu0 0.0
    %694 = vmatprep.mubr.f32.mxu0 0.0
    %695 = vmatmul.mubr.f32.gmra.mxu0 %v623
    %v696 = vpop.f32.mrf.mxu0
    %v697 = vadd.f32 0.0, %v696
    %v698 = vpop.f32.mrf.mxu0
    %699 = vmatprep.mubr.f32.mxu0 0.0
    %700 = vmatmul.mubr.f32.gmra.mxu0 %v626
    %v701 = vpop.f32.mrf.mxu0
    %v702 = vadd.f32 0.0, %v701
    %v703 = vpop.f32.mrf.mxu0
    %704 = vdwg.mxu0
    %v705 = vcombine.low %v609, %v586
    %v706 = vcombine.low %v610, %v591
    %v707 = vcombine.low %v611, %v596
    %v711 = vsel %vm184, %v612, 0
    %713 = vmatprep.subr.mxu0 0.0
    %714 = vmatpush1.msra.mxu0 0.0
    %715 = vmatprep.subr.mxu0 0.0
    %716 = vmatpush1.msra.mxu0 0.0
    %717 = vmatprep.subr.mxu0 0.0
    %718 = vmatpush1.msra.mxu0 0.0
    %719 = vmatprep.subr.mxu0 0.0
    %720 = vmatpush1.msra.mxu0 0.0
    %721 = vmatprep.subr.mxu0 0.0
    %722 = vmatpush1.msra.mxu0 0.0
    %723 = vmatprep.subr.mxu0 0.0
    %724 = vmatpush1.msra.mxu0 0.0
    %725 = vmatprep.subr.mxu0 0.0
    %726 = vmatpush1.msra.mxu0 0.0
    %727 = vmatprep.subr.mxu0 0.0
    %728 = vmatpush1.msra.mxu0 0.0
    %729 = vmatprep.subr.mxu0 0.0
    %730 = vmatpush1.msra.mxu0 0.0
    %731 = vmatprep.subr.mxu0 0.0
    %732 = vmatpush1.msra.mxu0 0.0
    %733 = vmatprep.subr.mxu0 0.0
    %734 = vmatpush1.msra.mxu0 0.0
    %735 = vmatprep.subr.mxu0 0.0
    %736 = vmatpush1.msra.mxu0 0.0
    %737 = vmatprep.subr.mxu0 0.0
    %738 = vmatpush1.msra.mxu0 %v711
    %739 = vmatprep.subr.mxu0 0.0
    %740 = vmatpush1.msra.mxu0 %v707
    %741 = vmatprep.subr.mxu0 0.0
    %742 = vmatpush1.msra.mxu0 %v706
    %743 = vmatprep.subr.mxu0 0.0
    %744 = vmatpush1.msra.mxu0 %v705
    %745 = vmatprep.subr.mxu0 0.0
    %746 = vmatpush2.msra.mxu0 0.0
    %747 = vmatprep.subr.mxu0 0.0
    %748 = vmatpush2.msra.mxu0 0.0
    %749 = vmatprep.subr.mxu0 0.0
    %750 = vmatpush2.msra.mxu0 0.0
    %751 = vmatprep.subr.mxu0 0.0
    %752 = vmatpush2.msra.mxu0 0.0
    %753 = vmatprep.subr.mxu0 0.0
    %754 = vmatpush2.msra.mxu0 0.0
    %755 = vmatprep.subr.mxu0 0.0
    %756 = vmatpush2.msra.mxu0 0.0
    %757 = vmatprep.subr.mxu0 0.0
    %758 = vmatpush2.msra.mxu0 0.0
    %759 = vmatprep.subr.mxu0 0.0
    %760 = vmatpush2.msra.mxu0 0.0
    %761 = vmatprep.subr.mxu0 0.0
    %762 = vmatpush2.msra.mxu0 0.0
    %763 = vmatprep.subr.mxu0 0.0
    %764 = vmatpush2.msra.mxu0 0.0
    %765 = vmatprep.subr.mxu0 0.0
    %766 = vmatpush2.msra.mxu0 0.0
    %767 = vmatprep.subr.mxu0 0.0
    %768 = vmatpush2.msra.mxu0 0.0
    %769 = vmatprep.subr.mxu0 0.0
    %770 = vmatpush2.msra.mxu0 0.0
    %771 = vmatprep.subr.mxu0 0.0
    %772 = vmatpush2.msra.mxu0 0.0
    %773 = vmatprep.subr.mxu0 0.0
    %774 = vmatpush2.msra.mxu0 0.0
    %775 = vmatprep.subr.mxu0 0.0
    %776 = vmatpush2.msra.mxu0 0.0
    %777 = vmatprep.mubr.f32.mxu0 0.0
    %778 = vmatmul.mubr.f32.gmra.mxu0 %v623
    %v779 = vpop.f32.mrf.mxu0
    %v780 = vadd.f32 0.0, %v779
    %v781 = vpop.f32.mrf.mxu0
    %782 = vmatprep.mubr.f32.mxu0 0.0
    %783 = vmatmul.mubr.f32.gmra.mxu0 %v626
    %v784 = vpop.f32.mrf.mxu0
    %v785 = vadd.f32 0.0, %v784
    %v786 = vpop.f32.mrf.mxu0
    %787 = vdwg.mxu0
    %v792 = vrot.slane %v697, 1
    %v793 = vrot.slane %v702, 1
    %v794 = vsel %vm67, %v792, %v793
    %v795 = vrot.slane %v780, 1
    %v796 = vrot.slane %v785, 1
    %v797 = vsel %vm67, %v795, %v796
    %798 = vrot.lane.b32.xlu0 %v794, 84
    %v799 = vpop.permute.xlu0 %798
    %800 = vrot.lane.b32.xlu0 %v793, 84
    %v801 = vpop.permute.xlu0 %800
    %802 = vrot.lane.b32.xlu0 %v797, 84
    %v803 = vpop.permute.xlu0 %802
    %804 = vrot.lane.b32.xlu0 %v796, 84
    %v805 = vpop.permute.xlu0 %804
    %v810 = vrot.slane %v697, 2
    %v811 = vrot.slane %v702, 2
    %v812 = vsel %vm106, %v810, %v811
    %v813 = vrot.slane %v780, 2
    %v814 = vrot.slane %v785, 2
    %v815 = vsel %vm106, %v813, %v814
    %816 = vrot.lane.b32.xlu0 %v812, 40
    %v817 = vpop.permute.xlu0 %816
    %818 = vrot.lane.b32.xlu0 %v811, 40
    %v819 = vpop.permute.xlu0 %818
    %820 = vrot.lane.b32.xlu0 %v815, 40
    %v821 = vpop.permute.xlu0 %820
    %822 = vrot.lane.b32.xlu0 %v814, 40
    %v823 = vpop.permute.xlu0 %822
    %v828 = vrot.slane %v697, 3
    %v829 = vrot.slane %v702, 3
    %v830 = vsel %vm145, %v828, %v829
    %v831 = vrot.slane %v780, 3
    %v832 = vrot.slane %v785, 3
    %v833 = vsel %vm145, %v831, %v832
    %834 = vrot.lane.b32.xlu0 %v830, 124
    %v835 = vpop.permute.xlu0 %834
    %836 = vrot.lane.b32.xlu0 %v829, 124
    %v837 = vpop.permute.xlu0 %836
    %838 = vrot.lane.b32.xlu0 %v833, 124
    %v839 = vpop.permute.xlu0 %838
    %840 = vrot.lane.b32.xlu0 %v832, 124
    %v841 = vpop.permute.xlu0 %840
    %v846 = vrot.slane %v697, 4
    %v847 = vrot.slane %v702, 4
    %v848 = vsel %vm184, %v846, %v847
    %v849 = vrot.slane %v780, 4
    %v850 = vrot.slane %v785, 4
    %v851 = vsel %vm184, %v849, %v850
    %852 = vrot.lane.b32.xlu0 %v848, 80
    %v853 = vpop.permute.xlu0 %852
    %854 = vrot.lane.b32.xlu0 %v847, 80
    %v855 = vpop.permute.xlu0 %854
    %856 = vrot.lane.b32.xlu0 %v851, 80
    %v857 = vpop.permute.xlu0 %856
    %858 = vrot.lane.b32.xlu0 %v850, 80
    %v859 = vpop.permute.xlu0 %858
    %vm864 = vcmask 687104
    %v865 = vsel %vm864, %v697, %v799
    %v866 = vsel %vm864, %v702, %v801
    %v867 = vsel %vm864, %v780, %v803
    %v868 = vsel %vm864, %v785, %v805
    %v869 = vsel %vm477, %v799, %v817
    %v870 = vsel %vm477, %v801, %v819
    %v871 = vsel %vm477, %v803, %v821
    %v872 = vsel %vm477, %v805, %v823
    %vm873 = vcmask 1014784
    %v874 = vsel %vm873, %v869, %v835
    %v875 = vsel %vm873, %v870, %v837
    %v876 = vsel %vm873, %v871, %v839
    %v877 = vsel %vm873, %v872, %v841
    %vm878 = vcmask 654336
    %v879 = vsel %vm878, %v835, %v853
    %v880 = vsel %vm878, %v837, %v855
    %v881 = vsel %vm878, %v839, %v857
    %v882 = vsel %vm878, %v841, %v859
    %v895 = vcombine.low %v865, %v874
    %v896 = vcombine.high %v865, %v874
    %v897 = vcombine.low %v879, %v853
    %v898 = vcombine.high %v879, %v853
    %v900 = vunpack.c.l.s4 1983009808
    %v901 = vunpack.c.0.s8 %v900
    %v902 = vlaneseq
    %v903 = vshrl.u32 %v902, 7
    %v904 = vsub.s32 %v901, %v903
    %v905 = vrot.slane %v895, %v904
    %v907 = vunpack.c.l.s4 1983009808
    %v908 = vunpack.c.0.s8 %v907
    %v909 = vlaneseq
    %v910 = vshrl.u32 %v909, 7
    %v911 = vsub.s32 %v908, %v910
    %v912 = vrot.slane %v896, %v911
    %v914 = vunpack.c.l.s4 1983009808
    %v915 = vunpack.c.0.s8 %v914
    %v916 = vlaneseq
    %v917 = vshrl.u32 %v916, 7
    %v918 = vsub.s32 %v915, %v917
    %v919 = vrot.slane %v897, %v918
    %v921 = vunpack.c.l.s4 1983009808
    %v922 = vunpack.c.0.s8 %v921
    %v923 = vlaneseq
    %v924 = vshrl.u32 %v923, 7
    %v925 = vsub.s32 %v922, %v924
    %v926 = vrot.slane %v898, %v925
    %v927 = vcombine.low %v905, %v919
    %v928 = vcombine.high %v905, %v919
    %v929 = vcombine.low %v912, %v926
    %v930 = vcombine.high %v912, %v926
    %v931 = vcombine.low %v866, %v875
    %v932 = vcombine.low %v880, %v855
    %v934 = vunpack.c.l.s4 1983009808
    %v935 = vunpack.c.0.s8 %v934
    %v936 = vlaneseq
    %v937 = vshrl.u32 %v936, 7
    %v938 = vsub.s32 %v935, %v937
    %v939 = vrot.slane %v931, %v938
    %v941 = vunpack.c.l.s4 1983009808
    %v942 = vunpack.c.0.s8 %v941
    %v943 = vlaneseq
    %v944 = vshrl.u32 %v943, 7
    %v945 = vsub.s32 %v942, %v944
    %v946 = vrot.slane %v932, %v945
    %v947 = vcombine.low %v939, %v946
    %v948 = vcombine.low %v867, %v876
    %v949 = vcombine.high %v867, %v876
    %v950 = vcombine.low %v881, %v857
    %v951 = vcombine.high %v881, %v857
    %v953 = vunpack.c.l.s4 1983009808
    %v954 = vunpack.c.0.s8 %v953
    %v955 = vlaneseq
    %v956 = vshrl.u32 %v955, 7
    %v957 = vsub.s32 %v954, %v956
    %v958 = vrot.slane %v948, %v957
    %v960 = vunpack.c.l.s4 1983009808
    %v961 = vunpack.c.0.s8 %v960
    %v962 = vlaneseq
    %v963 = vshrl.u32 %v962, 7
    %v964 = vsub.s32 %v961, %v963
    %v965 = vrot.slane %v949, %v964
    %v967 = vunpack.c.l.s4 1983009808
    %v968 = vunpack.c.0.s8 %v967
    %v969 = vlaneseq
    %v970 = vshrl.u32 %v969, 7
    %v971 = vsub.s32 %v968, %v970
    %v972 = vrot.slane %v950, %v971
    %v974 = vunpack.c.l.s4 1983009808
    %v975 = vunpack.c.0.s8 %v974
    %v976 = vlaneseq
    %v977 = vshrl.u32 %v976, 7
    %v978 = vsub.s32 %v975, %v977
    %v979 = vrot.slane %v951, %v978
    %v980 = vcombine.low %v958, %v972
    %v981 = vcombine.high %v958, %v972
    %v982 = vcombine.low %v965, %v979
    %v983 = vcombine.high %v965, %v979
    %v984 = vcombine.low %v868, %v877
    %v985 = vcombine.low %v882, %v859
    %v987 = vunpack.c.l.s4 1983009808
    %v988 = vunpack.c.0.s8 %v987
    %v989 = vlaneseq
    %v990 = vshrl.u32 %v989, 7
    %v991 = vsub.s32 %v988, %v990
    %v992 = vrot.slane %v984, %v991
    %v994 = vunpack.c.l.s4 1983009808
    %v995 = vunpack.c.0.s8 %v994
    %v996 = vlaneseq
    %v997 = vshrl.u32 %v996, 7
    %v998 = vsub.s32 %v995, %v997
    %v999 = vrot.slane %v985, %v998
    %v1000 = vcombine.low %v992, %v999
    %v1001 = vld [vmem:[%s5] sm:$0xff]
    %v1002 = vld [vmem:[%s5 + $0x8] sm:$0xff]
    %v1003 = vld [vmem:[%s5 + $0x10] sm:$0xff]
    %v1004 = vld [vmem:[%s5 + $0x18] sm:$0xff]
    %v1005 = vld [vmem:[%s5 + $0x20] sm:$0xff]
    %v1006 = vld [vmem:[%s5 + $0x28] sm:$0xff]
    %v1007 = vld [vmem:[%s5 + $0x30] sm:$0xff]
    %v1008 = vld [vmem:[%s5 + $0x38] sm:$0xff]
    %v1009 = vld [vmem:[%s5 + $0x40] sm:$0xff]
    %v1010 = vld [vmem:[%s5 + $0x48] sm:$0xff]
    %v1011 = vld [vmem:[%s5 + $0x50] sm:$0xff]
    %v1012 = vld [vmem:[%s5 + $0x58] sm:$0xff]
    %v1013 = vld [vmem:[%s5 + $0x60] sm:$0xff]
    %v1014 = vld [vmem:[%s5 + $0x68] sm:$0xff]
    %v1015 = vld [vmem:[%s5 + $0x70] sm:$0xff]
    %v1016 = vld [vmem:[%s5 + $0x78] sm:$0xff]
    %v1017 = vld [vmem:[%s5 + $0x80] sm:$0xff]
    %v1018 = vld [vmem:[%s5 + $0x88] sm:$0xff]
    %v1019 = vld [vmem:[%s5 + $0x90] sm:$0xff]
    %v1020 = vld [vmem:[%s5 + $0x98] sm:$0xff]
    %v1021 = vld [vmem:[%s5 + $0xa0] sm:$0xff]
    %v1022 = vld [vmem:[%s5 + $0xa8] sm:$0xff]
    %v1023 = vld [vmem:[%s5 + $0xb0] sm:$0xff]
    %v1024 = vld [vmem:[%s5 + $0xb8] sm:$0xff]
    %v1025 = vld [vmem:[%s5 + $0xc0] sm:$0xff]
    %v1026 = vld [vmem:[%s5 + $0xc8] sm:$0xff]
    %v1027 = vld [vmem:[%s5 + $0xd0] sm:$0xff]
    %v1028 = vld [vmem:[%s5 + $0xd8] sm:$0xff]
    %v1029 = vld [vmem:[%s5 + $0xe0] sm:$0xff]
    %v1030 = vld [vmem:[%s5 + $0xe8] sm:$0xff]
    %v1031 = vld [vmem:[%s5 + $0xf0] sm:$0xff]
    %v1032 = vld [vmem:[%s5 + $0xf8] sm:$0xff]
    %v1033 = vld [vmem:[%s5 + $0x100] sm:$0xff]
    %v1034 = vld [vmem:[%s5 + $0x108] sm:$0xff]
    %v1035 = vld [vmem:[%s5 + $0x110] sm:$0xff]
    %v1036 = vld [vmem:[%s5 + $0x118] sm:$0xff]
    %v1037 = vld [vmem:[%s5 + $0x120] sm:$0xff]
    %v1038 = vld [vmem:[%s5 + $0x128] sm:$0xff]
    %v1039 = vld [vmem:[%s5 + $0x130] sm:$0xff]
    %v1040 = vld [vmem:[%s5 + $0x138] sm:$0xff]
    %v1041 = vld [vmem:[%s5 + $0x140] sm:$0xff]
    %v1042 = vld [vmem:[%s5 + $0x148] sm:$0xff]
    %v1043 = vld [vmem:[%s5 + $0x150] sm:$0xff]
    %v1044 = vld [vmem:[%s5 + $0x158] sm:$0xff]
    %v1045 = vld [vmem:[%s5 + $0x160] sm:$0xff]
    %v1046 = vld [vmem:[%s5 + $0x168] sm:$0xff]
    %v1047 = vld [vmem:[%s5 + $0x170] sm:$0xff]
    %v1048 = vld [vmem:[%s5 + $0x178] sm:$0xff]
    %v1049 = vld [vmem:[%s5 + $0x180] sm:$0xff]
    %v1050 = vld [vmem:[%s5 + $0x188] sm:$0xff]
    %v1051 = vld [vmem:[%s5 + $0x190] sm:$0xff]
    %v1052 = vld [vmem:[%s5 + $0x198] sm:$0xff]
    %v1053 = vld [vmem:[%s5 + $0x1a0] sm:$0xff]
    %v1054 = vld [vmem:[%s5 + $0x1a8] sm:$0xff]
    %v1055 = vld [vmem:[%s5 + $0x1b0] sm:$0xff]
    %v1056 = vld [vmem:[%s5 + $0x1b8] sm:$0xff]
    %v1057 = vld [vmem:[%s5 + $0x1c0] sm:$0xff]
    %v1058 = vld [vmem:[%s5 + $0x1c8] sm:$0xff]
    %v1059 = vld [vmem:[%s5 + $0x1d0] sm:$0xff]
    %v1060 = vld [vmem:[%s5 + $0x1d8] sm:$0xff]
    %v1061 = vld [vmem:[%s5 + $0x1e0] sm:$0xff]
    %v1062 = vld [vmem:[%s5 + $0x1e8] sm:$0xff]
    %v1063 = vld [vmem:[%s5 + $0x1f0] sm:$0xff]
    %v1064 = vld [vmem:[%s5 + $0x1f8] sm:$0xff]
    %v1065 = vld [vmem:[%s5 + $0x200] sm:$0xff]
    %v1066 = vld [vmem:[%s5 + $0x208] sm:$0xff]
    %v1067 = vld [vmem:[%s5 + $0x210] sm:$0xff]
    %v1068 = vld [vmem:[%s5 + $0x218] sm:$0xff]
    %v1069 = vld [vmem:[%s5 + $0x220] sm:$0xff]
    %v1070 = vld [vmem:[%s5 + $0x228] sm:$0xff]
    %v1071 = vld [vmem:[%s5 + $0x230] sm:$0xff]
    %v1072 = vld [vmem:[%s5 + $0x238] sm:$0xff]
    %v1073 = vld [vmem:[%s5 + $0x240] sm:$0xff]
    %v1074 = vld [vmem:[%s5 + $0x248] sm:$0xff]
    %v1075 = vld [vmem:[%s5 + $0x250] sm:$0xff]
    %v1076 = vld [vmem:[%s5 + $0x258] sm:$0xff]
    %v1077 = vld [vmem:[%s5 + $0x260] sm:$0xff]
    %v1078 = vld [vmem:[%s5 + $0x268] sm:$0xff]
    %v1079 = vld [vmem:[%s5 + $0x270] sm:$0xff]
    %v1080 = vld [vmem:[%s5 + $0x278] sm:$0xff]
    %v1081 = vld [vmem:[%s5 + $0x280] sm:$0xff]
    %v1082 = vld [vmem:[%s5 + $0x288] sm:$0xff]
    %v1083 = vld [vmem:[%s5 + $0x290] sm:$0xff]
    %v1084 = vld [vmem:[%s5 + $0x298] sm:$0xff]
    %v1085 = vld [vmem:[%s5 + $0x2a0] sm:$0xff]
    %v1086 = vld [vmem:[%s5 + $0x2a8] sm:$0xff]
    %v1087 = vld [vmem:[%s5 + $0x2b0] sm:$0xff]
    %v1088 = vld [vmem:[%s5 + $0x2b8] sm:$0xff]
    %v1089 = vld [vmem:[%s5 + $0x2c0] sm:$0xff]
    %v1090 = vld [vmem:[%s5 + $0x2c8] sm:$0xff]
    %v1091 = vld [vmem:[%s5 + $0x2d0] sm:$0xff]
    %v1092 = vld [vmem:[%s5 + $0x2d8] sm:$0xff]
    %v1093 = vld [vmem:[%s5 + $0x2e0] sm:$0xff]
    %v1094 = vld [vmem:[%s5 + $0x2e8] sm:$0xff]
    %v1095 = vld [vmem:[%s5 + $0x2f0] sm:$0xff]
    %v1096 = vld [vmem:[%s5 + $0x2f8] sm:$0xff]
    %v1097 = vld [vmem:[%s5 + $0x300] sm:$0xff]
    %v1098 = vld [vmem:[%s5 + $0x308] sm:$0xff]
    %v1099 = vld [vmem:[%s5 + $0x310] sm:$0xff]
    %v1100 = vld [vmem:[%s5 + $0x318] sm:$0xff]
    %v1101 = vld [vmem:[%s5 + $0x320] sm:$0xff]
    %v1102 = vld [vmem:[%s5 + $0x328] sm:$0xff]
    %v1103 = vld [vmem:[%s5 + $0x330] sm:$0xff]
    %v1104 = vld [vmem:[%s5 + $0x338] sm:$0xff]
    %v1105 = vld [vmem:[%s5 + $0x340] sm:$0xf]
    %v1106 = vld [vmem:[%s5 + $0x348] sm:$0xf]
    %v1107 = vld [vmem:[%s6] sm:$0x3]
    %v1109 = vlaneseq
    %v1110 = vshrl.u32 %v1109, 7
    %v1111 = vsub.s32 0, %v1110
    %v1112 = vrot.slane %v1107, %v1111
    %v1113 = vlaneseq
    %v1114 = vshrl.u32 %v1113, 7
    %v1115 = vsub.s32 1, %v1114
    %v1116 = vrot.slane %v1107, %v1115
    %v1119 = vcombine.low %v927, %v928
    %v1120 = vcombine.high %v927, %v928
    %v1121 = vcombine.low %v929, %v930
    %v1122 = vcombine.high %v929, %v930
    %v1124 = vunpack.c.l.s4 1983009808
    %v1125 = vunpack.c.0.s8 %v1124
    %v1126 = vlaneseq
    %v1127 = vshrl.u32 %v1126, 7
    %v1128 = vsub.s32 %v1125, %v1127
    %v1129 = vrot.slane %v1119, %v1128
    %v1131 = vunpack.c.l.s4 1983009808
    %v1132 = vunpack.c.0.s8 %v1131
    %v1133 = vlaneseq
    %v1134 = vshrl.u32 %v1133, 7
    %v1135 = vsub.s32 %v1132, %v1134
    %v1136 = vrot.slane %v1120, %v1135
    %v1138 = vunpack.c.l.s4 1983009808
    %v1139 = vunpack.c.0.s8 %v1138
    %v1140 = vlaneseq
    %v1141 = vshrl.u32 %v1140, 7
    %v1142 = vsub.s32 %v1139, %v1141
    %v1143 = vrot.slane %v1121, %v1142
    %v1145 = vunpack.c.l.s4 1983009808
    %v1146 = vunpack.c.0.s8 %v1145
    %v1147 = vlaneseq
    %v1148 = vshrl.u32 %v1147, 7
    %v1149 = vsub.s32 %v1146, %v1148
    %v1150 = vrot.slane %v1122, %v1149
    %v1151 = vcombine.low %v1129, %v1143
    %v1152 = vcombine.high %v1129, %v1143
    %v1153 = vcombine.low %v1136, %v1150
    %v1154 = vcombine.high %v1136, %v1150
    %v1155 = vcombine.low %v947, %v980
    %v1156 = vcombine.high %v947, %v980
    %v1157 = vcombine.low %v981, %v982
    %v1158 = vcombine.high %v981, %v982
    %v1160 = vunpack.c.l.s4 1983009808
    %v1161 = vunpack.c.0.s8 %v1160
    %v1162 = vlaneseq
    %v1163 = vshrl.u32 %v1162, 7
    %v1164 = vsub.s32 %v1161, %v1163
    %v1165 = vrot.slane %v1155, %v1164
    %v1167 = vunpack.c.l.s4 1983009808
    %v1168 = vunpack.c.0.s8 %v1167
    %v1169 = vlaneseq
    %v1170 = vshrl.u32 %v1169, 7
    %v1171 = vsub.s32 %v1168, %v1170
    %v1172 = vrot.slane %v1156, %v1171
    %v1174 = vunpack.c.l.s4 1983009808
    %v1175 = vunpack.c.0.s8 %v1174
    %v1176 = vlaneseq
    %v1177 = vshrl.u32 %v1176, 7
    %v1178 = vsub.s32 %v1175, %v1177
    %v1179 = vrot.slane %v1157, %v1178
    %v1181 = vunpack.c.l.s4 1983009808
    %v1182 = vunpack.c.0.s8 %v1181
    %v1183 = vlaneseq
    %v1184 = vshrl.u32 %v1183, 7
    %v1185 = vsub.s32 %v1182, %v1184
    %v1186 = vrot.slane %v1158, %v1185
    %v1187 = vcombine.low %v1165, %v1179
    %v1188 = vcombine.high %v1165, %v1179
    %v1189 = vcombine.low %v1172, %v1186
    %v1190 = vcombine.high %v1172, %v1186
    %v1191 = vcombine.low %v983, %v1000
    %v1192 = vcombine.high %v983, %v1000
    %v1194 = vunpack.c.l.s4 1983009808
    %v1195 = vunpack.c.0.s8 %v1194
    %v1196 = vlaneseq
    %v1197 = vshrl.u32 %v1196, 7
    %v1198 = vsub.s32 %v1195, %v1197
    %v1199 = vrot.slane %v1191, %v1198
    %v1201 = vunpack.c.l.s4 1983009808
    %v1202 = vunpack.c.0.s8 %v1201
    %v1203 = vlaneseq
    %v1204 = vshrl.u32 %v1203, 7
    %v1205 = vsub.s32 %v1202, %v1204
    %v1206 = vrot.slane %v1192, %v1205
    %v1207 = vcombine.high %v1199, %v1199
    %v1208 = vcombine.high %v1206, %v1206
    %vm1218 = vcmask 293888
    %v1219 = vsel %vm1218, %v1154, 0
    %v1221 = vsel %vm1218, %v1190, 0
    %v1223 = vsel %vm1218, %v1208, 0
    %v1226 = vsel %vm184, %v1105, 0
    %v1229 = vsel %vm184, %v1106, 0
    %1231 = vmatprep.subr.mxu0 %v1032
    %1232 = vmatpush1.msra.mxu0 %v1031
    %1233 = vmatprep.subr.mxu0 %v1030
    %1234 = vmatpush1.msra.mxu0 %v1029
    %1235 = vmatprep.subr.mxu0 %v1028
    %1236 = vmatpush1.msra.mxu0 %v1027
    %1237 = vmatprep.subr.mxu0 %v1026
    %1238 = vmatpush1.msra.mxu0 %v1025
    %1239 = vmatprep.subr.mxu0 %v1024
    %1240 = vmatpush1.msra.mxu0 %v1023
    %1241 = vmatprep.subr.mxu0 %v1022
    %1242 = vmatpush1.msra.mxu0 %v1021
    %1243 = vmatprep.subr.mxu0 %v1020
    %1244 = vmatpush1.msra.mxu0 %v1019
    %1245 = vmatprep.subr.mxu0 %v1018
    %1246 = vmatpush1.msra.mxu0 %v1017
    %1247 = vmatprep.subr.mxu0 %v1016
    %1248 = vmatpush1.msra.mxu0 %v1015
    %1249 = vmatprep.subr.mxu0 %v1014
    %1250 = vmatpush1.msra.mxu0 %v1013
    %1251 = vmatprep.subr.mxu0 %v1012
    %1252 = vmatpush1.msra.mxu0 %v1011
    %1253 = vmatprep.subr.mxu0 %v1010
    %1254 = vmatpush1.msra.mxu0 %v1009
    %1255 = vmatprep.subr.mxu0 %v1008
    %1256 = vmatpush1.msra.mxu0 %v1007
    %1257 = vmatprep.subr.mxu0 %v1006
    %1258 = vmatpush1.msra.mxu0 %v1005
    %1259 = vmatprep.subr.mxu0 %v1004
    %1260 = vmatpush1.msra.mxu0 %v1003
    %1261 = vmatprep.subr.mxu0 %v1002
    %1262 = vmatpush1.msra.mxu0 %v1001
    %1263 = vmatprep.subr.mxu0 %v1064
    %1264 = vmatpush2.msra.mxu0 %v1063
    %1265 = vmatprep.subr.mxu0 %v1062
    %1266 = vmatpush2.msra.mxu0 %v1061
    %1267 = vmatprep.subr.mxu0 %v1060
    %1268 = vmatpush2.msra.mxu0 %v1059
    %1269 = vmatprep.subr.mxu0 %v1058
    %1270 = vmatpush2.msra.mxu0 %v1057
    %1271 = vmatprep.subr.mxu0 %v1056
    %1272 = vmatpush2.msra.mxu0 %v1055
    %1273 = vmatprep.subr.mxu0 %v1054
    %1274 = vmatpush2.msra.mxu0 %v1053
    %1275 = vmatprep.subr.mxu0 %v1052
    %1276 = vmatpush2.msra.mxu0 %v1051
    %1277 = vmatprep.subr.mxu0 %v1050
    %1278 = vmatpush2.msra.mxu0 %v1049
    %1279 = vmatprep.subr.mxu0 %v1048
    %1280 = vmatpush2.msra.mxu0 %v1047
    %1281 = vmatprep.subr.mxu0 %v1046
    %1282 = vmatpush2.msra.mxu0 %v1045
    %1283 = vmatprep.subr.mxu0 %v1044
    %1284 = vmatpush2.msra.mxu0 %v1043
    %1285 = vmatprep.subr.mxu0 %v1042
    %1286 = vmatpush2.msra.mxu0 %v1041
    %1287 = vmatprep.subr.mxu0 %v1040
    %1288 = vmatpush2.msra.mxu0 %v1039
    %1289 = vmatprep.subr.mxu0 %v1038
    %1290 = vmatpush2.msra.mxu0 %v1037
    %1291 = vmatprep.subr.mxu0 %v1036
    %1292 = vmatpush2.msra.mxu0 %v1035
    %1293 = vmatprep.subr.mxu0 %v1034
    %1294 = vmatpush2.msra.mxu0 %v1033
    %1295 = vmatprep.mubr.f32.mxu0 %v1152
    %1296 = vmatmul.mubr.f32.gmra.mxu0 %v1151
    %v1297 = vpop.f32.mrf.mxu0
    %v1298 = vadd.f32 %v1112, %v1297
    %v1299 = vpop.f32.mrf.mxu0
    %v1300 = vadd.f32 %v1116, %v1299
    %1301 = vmatprep.mubr.f32.mxu0 %v1188
    %1302 = vmatmul.mubr.f32.gmra.mxu0 %v1187
    %v1303 = vpop.f32.mrf.mxu0
    %v1304 = vadd.f32 %v1112, %v1303
    %v1305 = vpop.f32.mrf.mxu0
    %v1306 = vadd.f32 %v1116, %v1305
    %1307 = vmatprep.mubr.f32.mxu0 %v1207
    %1308 = vmatmul.mubr.f32.gmra.mxu0 %v1199
    %v1309 = vpop.f32.mrf.mxu0
    %v1310 = vadd.f32 %v1112, %v1309
    %v1311 = vpop.f32.mrf.mxu0
    %v1312 = vadd.f32 %v1116, %v1311
    %1313 = vdwg.mxu0
    %1314 = vmatprep.subr.mxu0 %v1096
    %1315 = vmatpush1.msra.mxu0 %v1095
    %1316 = vmatprep.subr.mxu0 %v1094
    %1317 = vmatpush1.msra.mxu0 %v1093
    %1318 = vmatprep.subr.mxu0 %v1092
    %1319 = vmatpush1.msra.mxu0 %v1091
    %1320 = vmatprep.subr.mxu0 %v1090
    %1321 = vmatpush1.msra.mxu0 %v1089
    %1322 = vmatprep.subr.mxu0 %v1088
    %1323 = vmatpush1.msra.mxu0 %v1087
    %1324 = vmatprep.subr.mxu0 %v1086
    %1325 = vmatpush1.msra.mxu0 %v1085
    %1326 = vmatprep.subr.mxu0 %v1084
    %1327 = vmatpush1.msra.mxu0 %v1083
    %1328 = vmatprep.subr.mxu0 %v1082
    %1329 = vmatpush1.msra.mxu0 %v1081
    %1330 = vmatprep.subr.mxu0 %v1080
    %1331 = vmatpush1.msra.mxu0 %v1079
    %1332 = vmatprep.subr.mxu0 %v1078
    %1333 = vmatpush1.msra.mxu0 %v1077
    %1334 = vmatprep.subr.mxu0 %v1076
    %1335 = vmatpush1.msra.mxu0 %v1075
    %1336 = vmatprep.subr.mxu0 %v1074
    %1337 = vmatpush1.msra.mxu0 %v1073
    %1338 = vmatprep.subr.mxu0 %v1072
    %1339 = vmatpush1.msra.mxu0 %v1071
    %1340 = vmatprep.subr.mxu0 %v1070
    %1341 = vmatpush1.msra.mxu0 %v1069
    %1342 = vmatprep.subr.mxu0 %v1068
    %1343 = vmatpush1.msra.mxu0 %v1067
    %1344 = vmatprep.subr.mxu0 %v1066
    %1345 = vmatpush1.msra.mxu0 %v1065
    %1346 = vmatprep.subr.mxu0 0.0
    %1347 = vmatpush2.msra.mxu0 0.0
    %1348 = vmatprep.subr.mxu0 0.0
    %1349 = vmatpush2.msra.mxu0 0.0
    %1350 = vmatprep.subr.mxu0 0.0
    %1351 = vmatpush2.msra.mxu0 0.0
    %1352 = vmatprep.subr.mxu0 0.0
    %1353 = vmatpush2.msra.mxu0 0.0
    %1354 = vmatprep.subr.mxu0 0.0
    %1355 = vmatpush2.msra.mxu0 0.0
    %1356 = vmatprep.subr.mxu0 0.0
    %1357 = vmatpush2.msra.mxu0 0.0
    %1358 = vmatprep.subr.mxu0 0.0
    %1359 = vmatpush2.msra.mxu0 0.0
    %1360 = vmatprep.subr.mxu0 0.0
    %1361 = vmatpush2.msra.mxu0 0.0
    %1362 = vmatprep.subr.mxu0 0.0
    %1363 = vmatpush2.msra.mxu0 0.0
    %1364 = vmatprep.subr.mxu0 0.0
    %1365 = vmatpush2.msra.mxu0 0.0
    %1366 = vmatprep.subr.mxu0 0.0
    %1367 = vmatpush2.msra.mxu0 0.0
    %1368 = vmatprep.subr.mxu0 %v1229
    %1369 = vmatpush2.msra.mxu0 %v1226
    %1370 = vmatprep.subr.mxu0 %v1104
    %1371 = vmatpush2.msra.mxu0 %v1103
    %1372 = vmatprep.subr.mxu0 %v1102
    %1373 = vmatpush2.msra.mxu0 %v1101
    %1374 = vmatprep.subr.mxu0 %v1100
    %1375 = vmatpush2.msra.mxu0 %v1099
    %1376 = vmatprep.subr.mxu0 %v1098
    %1377 = vmatpush2.msra.mxu0 %v1097
    %1378 = vmatprep.mubr.f32.mxu0 %v1219
    %1379 = vmatmul.mubr.f32.gmra.mxu0 %v1153
    %v1380 = vpop.f32.mrf.mxu0
    %v1381 = vadd.f32 %v1298, %v1380
    %v1382 = vpop.f32.mrf.mxu0
    %v1383 = vadd.f32 %v1300, %v1382
    %1384 = vmatprep.mubr.f32.mxu0 %v1221
    %1385 = vmatmul.mubr.f32.gmra.mxu0 %v1189
    %v1386 = vpop.f32.mrf.mxu0
    %v1387 = vadd.f32 %v1304, %v1386
    %v1388 = vpop.f32.mrf.mxu0
    %v1389 = vadd.f32 %v1306, %v1388
    %1390 = vmatprep.mubr.f32.mxu0 %v1223
    %1391 = vmatmul.mubr.f32.gmra.mxu0 %v1206
    %v1392 = vpop.f32.mrf.mxu0
    %v1393 = vadd.f32 %v1310, %v1392
    %v1394 = vpop.f32.mrf.mxu0
    %v1395 = vadd.f32 %v1312, %v1394
    %1396 = vdwg.mxu0
    %v1397 = vtanh.pop %v1381
    %v1398 = vtanh.pop %v1383
    %v1399 = vtanh.pop %v1387
    %v1400 = vtanh.pop %v1389
    %v1401 = vtanh.pop %v1393
    %v1402 = vtanh.pop %v1395
    %v1403 = vld [vmem:[%s8] sm:$0xff]
    %v1404 = vld [vmem:[%s8 + $0x8] sm:$0xff]
    %v1405 = vld [vmem:[%s8 + $0x10] sm:$0xff]
    %v1406 = vld [vmem:[%s8 + $0x18] sm:$0xff]
    %v1407 = vld [vmem:[%s8 + $0x20] sm:$0xff]
    %v1408 = vld [vmem:[%s8 + $0x28] sm:$0xff]
    %v1409 = vld [vmem:[%s8 + $0x30] sm:$0xff]
    %v1410 = vld [vmem:[%s8 + $0x38] sm:$0xff]
    %v1411 = vld [vmem:[%s8 + $0x40] sm:$0xff]
    %v1412 = vld [vmem:[%s8 + $0x48] sm:$0xff]
    %v1413 = vld [vmem:[%s8 + $0x50] sm:$0xff]
    %v1414 = vld [vmem:[%s8 + $0x58] sm:$0xff]
    %v1415 = vld [vmem:[%s8 + $0x60] sm:$0xff]
    %v1416 = vld [vmem:[%s8 + $0x68] sm:$0xff]
    %v1417 = vld [vmem:[%s8 + $0x70] sm:$0xff]
    %v1418 = vld [vmem:[%s8 + $0x78] sm:$0xff]
    %v1419 = vld [vmem:[%s8 + $0x80] sm:$0xff]
    %v1420 = vld [vmem:[%s8 + $0x88] sm:$0xff]
    %v1421 = vld [vmem:[%s8 + $0x90] sm:$0xff]
    %v1422 = vld [vmem:[%s8 + $0x98] sm:$0xff]
    %v1424 = vsel %vm199, %v1398, 0
    %v1427 = vsel %vm199, %v1400, 0
    %v1430 = vsel %vm199, %v1402, 0
    %1432 = vmatprep.subr.mxu0 0.0
    %1433 = vmatpush1.msra.mxu0 %v1418
    %1434 = vmatprep.subr.mxu0 0.0
    %1435 = vmatpush1.msra.mxu0 %v1417
    %1436 = vmatprep.subr.mxu0 0.0
    %1437 = vmatpush1.msra.mxu0 %v1416
    %1438 = vmatprep.subr.mxu0 0.0
    %1439 = vmatpush1.msra.mxu0 %v1415
    %1440 = vmatprep.subr.mxu0 0.0
    %1441 = vmatpush1.msra.mxu0 %v1414
    %1442 = vmatprep.subr.mxu0 0.0
    %1443 = vmatpush1.msra.mxu0 %v1413
    %1444 = vmatprep.subr.mxu0 0.0
    %1445 = vmatpush1.msra.mxu0 %v1412
    %1446 = vmatprep.subr.mxu0 0.0
    %1447 = vmatpush1.msra.mxu0 %v1411
    %1448 = vmatprep.subr.mxu0 0.0
    %1449 = vmatpush1.msra.mxu0 %v1410
    %1450 = vmatprep.subr.mxu0 0.0
    %1451 = vmatpush1.msra.mxu0 %v1409
    %1452 = vmatprep.subr.mxu0 0.0
    %1453 = vmatpush1.msra.mxu0 %v1408
    %1454 = vmatprep.subr.mxu0 0.0
    %1455 = vmatpush1.msra.mxu0 %v1407
    %1456 = vmatprep.subr.mxu0 0.0
    %1457 = vmatpush1.msra.mxu0 %v1406
    %1458 = vmatprep.subr.mxu0 0.0
    %1459 = vmatpush1.msra.mxu0 %v1405
    %1460 = vmatprep.subr.mxu0 0.0
    %1461 = vmatpush1.msra.mxu0 %v1404
    %1462 = vmatprep.subr.mxu0 0.0
    %1463 = vmatpush1.msra.mxu0 %v1403
    %1464 = vmatprep.subr.mxu0 0.0
    %1465 = vmatpush2.msra.mxu0 0.0
    %1466 = vmatprep.subr.mxu0 0.0
    %1467 = vmatpush2.msra.mxu0 0.0
    %1468 = vmatprep.subr.mxu0 0.0
    %1469 = vmatpush2.msra.mxu0 0.0
    %1470 = vmatprep.subr.mxu0 0.0
    %1471 = vmatpush2.msra.mxu0 0.0
    %1472 = vmatprep.subr.mxu0 0.0
    %1473 = vmatpush2.msra.mxu0 0.0
    %1474 = vmatprep.subr.mxu0 0.0
    %1475 = vmatpush2.msra.mxu0 0.0
    %1476 = vmatprep.subr.mxu0 0.0
    %1477 = vmatpush2.msra.mxu0 0.0
    %1478 = vmatprep.subr.mxu0 0.0
    %1479 = vmatpush2.msra.mxu0 0.0
    %1480 = vmatprep.subr.mxu0 0.0
    %1481 = vmatpush2.msra.mxu0 0.0
    %1482 = vmatprep.subr.mxu0 0.0
    %1483 = vmatpush2.msra.mxu0 0.0
    %1484 = vmatprep.subr.mxu0 0.0
    %1485 = vmatpush2.msra.mxu0 0.0
    %1486 = vmatprep.subr.mxu0 0.0
    %1487 = vmatpush2.msra.mxu0 0.0
    %1488 = vmatprep.subr.mxu0 0.0
    %1489 = vmatpush2.msra.mxu0 %v1422
    %1490 = vmatprep.subr.mxu0 0.0
    %1491 = vmatpush2.msra.mxu0 %v1421
    %1492 = vmatprep.subr.mxu0 0.0
    %1493 = vmatpush2.msra.mxu0 %v1420
    %1494 = vmatprep.subr.mxu0 0.0
    %1495 = vmatpush2.msra.mxu0 %v1419
    %1496 = vmatprep.mubr.f32.mxu0 %v1424
    %1497 = vmatmul.mubr.f32.gmra.mxu0 %v1397
    %v1498 = vpop.f32.mrf.mxu0
    %v1499 = vadd.f32 0.0, %v1498
    %v1500 = vpop.f32.mrf.mxu0
    %1501 = vmatprep.mubr.f32.mxu0 %v1427
    %1502 = vmatmul.mubr.f32.gmra.mxu0 %v1399
    %v1503 = vpop.f32.mrf.mxu0
    %v1504 = vadd.f32 0.0, %v1503
    %v1505 = vpop.f32.mrf.mxu0
    %1506 = vmatprep.mubr.f32.mxu0 %v1430
    %1507 = vmatmul.mubr.f32.gmra.mxu0 %v1401
    %v1508 = vpop.f32.mrf.mxu0
    %v1509 = vadd.f32 0.0, %v1508
    %v1510 = vpop.f32.mrf.mxu0
    %1511 = vdwg.mxu0
    %v1515 = vcombine.high %v1499, %v1499
    %v1517 = vunpack.c.l.s4 1983009808
    %v1518 = vunpack.c.0.s8 %v1517
    %v1519 = vlaneseq
    %v1520 = vshrl.u32 %v1519, 7
    %v1521 = vsub.s32 %v1518, %v1520
    %v1522 = vrot.slane %v1499, %v1521
    %v1524 = vunpack.c.l.s4 1983009808
    %v1525 = vunpack.c.0.s8 %v1524
    %v1526 = vlaneseq
    %v1527 = vshrl.u32 %v1526, 7
    %v1528 = vsub.s32 %v1525, %v1527
    %v1529 = vrot.slane %v1515, %v1528
    %v1530 = vcombine.high %v1522, %v1522
    %v1531 = vcombine.high %v1529, %v1529
    %v1532 = vcombine.high %v1504, %v1504
    %v1534 = vunpack.c.l.s4 1983009808
    %v1535 = vunpack.c.0.s8 %v1534
    %v1536 = vlaneseq
    %v1537 = vshrl.u32 %v1536, 7
    %v1538 = vsub.s32 %v1535, %v1537
    %v1539 = vrot.slane %v1504, %v1538
    %v1541 = vunpack.c.l.s4 1983009808
    %v1542 = vunpack.c.0.s8 %v1541
    %v1543 = vlaneseq
    %v1544 = vshrl.u32 %v1543, 7
    %v1545 = vsub.s32 %v1542, %v1544
    %v1546 = vrot.slane %v1532, %v1545
    %v1547 = vcombine.high %v1539, %v1539
    %v1548 = vcombine.high %v1546, %v1546
    %v1550 = vunpack.c.l.s4 1983009808
    %v1551 = vunpack.c.0.s8 %v1550
    %v1552 = vlaneseq
    %v1553 = vshrl.u32 %v1552, 7
    %v1554 = vsub.s32 %v1551, %v1553
    %v1555 = vrot.slane %v1509, %v1554
    %v1556 = vcombine.high %v1555, %v1555
    %v1557 = vld [vmem:[%s7] sm:$0x1f]
    %v1558 = vcombine.low %v1522, %v1530
    %v1559 = vcombine.low %v1529, %v1531
    %v1561 = vunpack.c.l.s4 1983009808
    %v1562 = vunpack.c.0.s8 %v1561
    %v1563 = vlaneseq
    %v1564 = vshrl.u32 %v1563, 7
    %v1565 = vsub.s32 %v1562, %v1564
    %v1566 = vrot.slane %v1558, %v1565
    %v1568 = vunpack.c.l.s4 1983009808
    %v1569 = vunpack.c.0.s8 %v1568
    %v1570 = vlaneseq
    %v1571 = vshrl.u32 %v1570, 7
    %v1572 = vsub.s32 %v1569, %v1571
    %v1573 = vrot.slane %v1559, %v1572
    %v1574 = vcombine.low %v1566, %v1573
    %v1576 = vunpack.c.l.s4 1983009808
    %v1577 = vunpack.c.0.s8 %v1576
    %v1578 = vlaneseq
    %v1579 = vshrl.u32 %v1578, 7
    %v1580 = vsub.s32 %v1577, %v1579
    %v1581 = vrot.slane %v1539, %v1580
    %vm1583 = vcmask 80896
    %v1585 = vsel %vm1583, %v1557, 0
    %vm1587 = vcmask 1041408
    %v1588 = vsel %vm1587, %v1581, 0
    %1590 = vmatprep.subr.mxu0 0.0
    %1591 = vmatpush1.msra.mxu0 0.0
    %1592 = vmatprep.subr.mxu0 0.0
    %1593 = vmatpush1.msra.mxu0 0.0
    %1594 = vmatprep.subr.mxu0 0.0
    %1595 = vmatpush1.msra.mxu0 0.0
    %1596 = vmatprep.subr.mxu0 0.0
    %1597 = vmatpush1.msra.mxu0 0.0
    %1598 = vmatprep.subr.mxu0 0.0
    %1599 = vmatpush1.msra.mxu0 0.0
    %1600 = vmatprep.subr.mxu0 0.0
    %1601 = vmatpush1.msra.mxu0 0.0
    %1602 = vmatprep.subr.mxu0 0.0
    %1603 = vmatpush1.msra.mxu0 0.0
    %1604 = vmatprep.subr.mxu0 0.0
    %1605 = vmatpush1.msra.mxu0 0.0
    %1606 = vmatprep.subr.mxu0 0.0
    %1607 = vmatpush1.msra.mxu0 0.0
    %1608 = vmatprep.subr.mxu0 0.0
    %1609 = vmatpush1.msra.mxu0 0.0
    %1610 = vmatprep.subr.mxu0 0.0
    %1611 = vmatpush1.msra.mxu0 0.0
    %1612 = vmatprep.subr.mxu0 0.0
    %1613 = vmatpush1.msra.mxu0 0.0
    %1614 = vmatprep.subr.mxu0 0.0
    %1615 = vmatpush1.msra.mxu0 0.0
    %1616 = vmatprep.subr.mxu0 0.0
    %1617 = vmatpush1.msra.mxu0 0.0
    %1618 = vmatprep.subr.mxu0 0.0
    %1619 = vmatpush1.msra.mxu0 %v1588
    %1620 = vmatprep.subr.mxu0 0.0
    %1621 = vmatpush1.msra.mxu0 %v1574
    %1622 = vmatprep.subr.mxu0 0.0
    %1623 = vmatpush2.msra.mxu0 0.0
    %1624 = vmatprep.subr.mxu0 0.0
    %1625 = vmatpush2.msra.mxu0 0.0
    %1626 = vmatprep.subr.mxu0 0.0
    %1627 = vmatpush2.msra.mxu0 0.0
    %1628 = vmatprep.subr.mxu0 0.0
    %1629 = vmatpush2.msra.mxu0 0.0
    %1630 = vmatprep.subr.mxu0 0.0
    %1631 = vmatpush2.msra.mxu0 0.0
    %1632 = vmatprep.subr.mxu0 0.0
    %1633 = vmatpush2.msra.mxu0 0.0
    %1634 = vmatprep.subr.mxu0 0.0
    %1635 = vmatpush2.msra.mxu0 0.0
    %1636 = vmatprep.subr.mxu0 0.0
    %1637 = vmatpush2.msra.mxu0 0.0
    %1638 = vmatprep.subr.mxu0 0.0
    %1639 = vmatpush2.msra.mxu0 0.0
    %1640 = vmatprep.subr.mxu0 0.0
    %1641 = vmatpush2.msra.mxu0 0.0
    %1642 = vmatprep.subr.mxu0 0.0
    %1643 = vmatpush2.msra.mxu0 0.0
    %1644 = vmatprep.subr.mxu0 0.0
    %1645 = vmatpush2.msra.mxu0 0.0
    %1646 = vmatprep.subr.mxu0 0.0
    %1647 = vmatpush2.msra.mxu0 0.0
    %1648 = vmatprep.subr.mxu0 0.0
    %1649 = vmatpush2.msra.mxu0 0.0
    %1650 = vmatprep.subr.mxu0 0.0
    %1651 = vmatpush2.msra.mxu0 0.0
    %1652 = vmatprep.subr.mxu0 0.0
    %1653 = vmatpush2.msra.mxu0 0.0
    %1654 = vmatprep.mubr.f32.mxu0 0.0
    %1655 = vmatmul.mubr.f32.gmra.mxu0 %v1585
    %v1656 = vpop.f32.mrf.mxu0
    %v1657 = vadd.f32 0.0, %v1656
    %v1658 = vpop.f32.mrf.mxu0
    %1659 = vdwg.mxu0
    %v1660 = vcombine.low %v1547, %v1546
    %v1661 = vcombine.low %v1548, %v1555
    %v1663 = vunpack.c.l.s4 1983009808
    %v1664 = vunpack.c.0.s8 %v1663
    %v1665 = vlaneseq
    %v1666 = vshrl.u32 %v1665, 7
    %v1667 = vsub.s32 %v1664, %v1666
    %v1668 = vrot.slane %v1660, %v1667
    %v1670 = vunpack.c.l.s4 1983009808
    %v1671 = vunpack.c.0.s8 %v1670
    %v1672 = vlaneseq
    %v1673 = vshrl.u32 %v1672, 7
    %v1674 = vsub.s32 %v1671, %v1673
    %v1675 = vrot.slane %v1661, %v1674
    %v1676 = vcombine.low %v1668, %v1675
    %v1678 = vunpack.c.l.s4 1983009808
    %v1679 = vunpack.c.0.s8 %v1678
    %v1680 = vlaneseq
    %v1681 = vshrl.u32 %v1680, 7
    %v1682 = vsub.s32 %v1679, %v1681
    %v1683 = vrot.slane %v1556, %v1682
    %v1685 = vsel %vm1587, %v1683, 0
    %1687 = vmatprep.subr.mxu0 0.0
    %1688 = vmatpush1.msra.mxu0 0.0
    %1689 = vmatprep.subr.mxu0 0.0
    %1690 = vmatpush1.msra.mxu0 0.0
    %1691 = vmatprep.subr.mxu0 0.0
    %1692 = vmatpush1.msra.mxu0 0.0
    %1693 = vmatprep.subr.mxu0 0.0
    %1694 = vmatpush1.msra.mxu0 0.0
    %1695 = vmatprep.subr.mxu0 0.0
    %1696 = vmatpush1.msra.mxu0 0.0
    %1697 = vmatprep.subr.mxu0 0.0
    %1698 = vmatpush1.msra.mxu0 0.0
    %1699 = vmatprep.subr.mxu0 0.0
    %1700 = vmatpush1.msra.mxu0 0.0
    %1701 = vmatprep.subr.mxu0 0.0
    %1702 = vmatpush1.msra.mxu0 0.0
    %1703 = vmatprep.subr.mxu0 0.0
    %1704 = vmatpush1.msra.mxu0 0.0
    %1705 = vmatprep.subr.mxu0 0.0
    %1706 = vmatpush1.msra.mxu0 0.0
    %1707 = vmatprep.subr.mxu0 0.0
    %1708 = vmatpush1.msra.mxu0 0.0
    %1709 = vmatprep.subr.mxu0 0.0
    %1710 = vmatpush1.msra.mxu0 0.0
    %1711 = vmatprep.subr.mxu0 0.0
    %1712 = vmatpush1.msra.mxu0 0.0
    %1713 = vmatprep.subr.mxu0 0.0
    %1714 = vmatpush1.msra.mxu0 0.0
    %1715 = vmatprep.subr.mxu0 0.0
    %1716 = vmatpush1.msra.mxu0 %v1685
    %1717 = vmatprep.subr.mxu0 0.0
    %1718 = vmatpush1.msra.mxu0 %v1676
    %1719 = vmatprep.subr.mxu0 0.0
    %1720 = vmatpush2.msra.mxu0 0.0
    %1721 = vmatprep.subr.mxu0 0.0
    %1722 = vmatpush2.msra.mxu0 0.0
    %1723 = vmatprep.subr.mxu0 0.0
    %1724 = vmatpush2.msra.mxu0 0.0
    %1725 = vmatprep.subr.mxu0 0.0
    %1726 = vmatpush2.msra.mxu0 0.0
    %1727 = vmatprep.subr.mxu0 0.0
    %1728 = vmatpush2.msra.mxu0 0.0
    %1729 = vmatprep.subr.mxu0 0.0
    %1730 = vmatpush2.msra.mxu0 0.0
    %1731 = vmatprep.subr.mxu0 0.0
    %1732 = vmatpush2.msra.mxu0 0.0
    %1733 = vmatprep.subr.mxu0 0.0
    %1734 = vmatpush2.msra.mxu0 0.0
    %1735 = vmatprep.subr.mxu0 0.0
    %1736 = vmatpush2.msra.mxu0 0.0
    %1737 = vmatprep.subr.mxu0 0.0
    %1738 = vmatpush2.msra.mxu0 0.0
    %1739 = vmatprep.subr.mxu0 0.0
    %1740 = vmatpush2.msra.mxu0 0.0
    %1741 = vmatprep.subr.mxu0 0.0
    %1742 = vmatpush2.msra.mxu0 0.0
    %1743 = vmatprep.subr.mxu0 0.0
    %1744 = vmatpush2.msra.mxu0 0.0
    %1745 = vmatprep.subr.mxu0 0.0
    %1746 = vmatpush2.msra.mxu0 0.0
    %1747 = vmatprep.subr.mxu0 0.0
    %1748 = vmatpush2.msra.mxu0 0.0
    %1749 = vmatprep.subr.mxu0 0.0
    %1750 = vmatpush2.msra.mxu0 0.0
    %1751 = vmatprep.mubr.f32.mxu0 0.0
    %1752 = vmatmul.mubr.f32.gmra.mxu0 %v1585
    %v1753 = vpop.f32.mrf.mxu0
    %v1754 = vadd.f32 0.0, %v1753
    %v1755 = vpop.f32.mrf.mxu0
    %1756 = vdwg.mxu0
    %v1759 = vrot.slane %v1657, 1
    %v1760 = vrot.slane %v1754, 1
    %1761 = vrot.lane.b32.xlu0 %v1759, 80
    %v1762 = vpop.permute.xlu0 %1761
    %1763 = vrot.lane.b32.xlu0 %v1760, 80
    %v1764 = vpop.permute.xlu0 %1763
    %v1767 = vrot.slane %v1657, 2
    %v1768 = vrot.slane %v1754, 2
    %1769 = vrot.lane.b32.xlu0 %v1767, 32
    %v1770 = vpop.permute.xlu0 %1769
    %1771 = vrot.lane.b32.xlu0 %v1768, 32
    %v1772 = vpop.permute.xlu0 %1771
    %v1775 = vrot.slane %v1657, 3
    %v1776 = vrot.slane %v1754, 3
    %1777 = vrot.lane.b32.xlu0 %v1775, 112
    %v1778 = vpop.permute.xlu0 %1777
    %1779 = vrot.lane.b32.xlu0 %v1776, 112
    %v1780 = vpop.permute.xlu0 %1779
    %v1783 = vrot.slane %v1657, 4
    %v1784 = vrot.slane %v1754, 4
    %1785 = vrot.lane.b32.xlu0 %v1783, 64
    %v1786 = vpop.permute.xlu0 %1785
    %1787 = vrot.lane.b32.xlu0 %v1784, 64
    %v1788 = vpop.permute.xlu0 %1787
    %v1791 = vsel %vm878, %v1657, %v1762
    %v1792 = vsel %vm878, %v1754, %v1764
    %v1793 = vsel %vm199, %v1762, %v1770
    %v1794 = vsel %vm199, %v1764, %v1772
    %vm1795 = vcmask 916480
    %v1796 = vsel %vm1795, %v1793, %v1778
    %v1797 = vsel %vm1795, %v1794, %v1780
    %v1798 = vsel %vm208, %v1778, %v1786
    %v1799 = vsel %vm208, %v1780, %v1788
    %v1800 = vld [vmem:[%s9] sm:$0xff]
    %v1801 = vld [vmem:[%s9 + $0x8] sm:$0xff]
    %v1802 = vld [vmem:[%s9 + $0x10] sm:$0xff]
    %v1803 = vld [vmem:[%s9 + $0x18] sm:$0xff]
    %v1804 = vld [vmem:[%s9 + $0x20] sm:$0xff]
    %v1805 = vld [vmem:[%s9 + $0x28] sm:$0xff]
    %v1806 = vld [vmem:[%s9 + $0x30] sm:$0xff]
    %v1807 = vld [vmem:[%s9 + $0x38] sm:$0xff]
    %v1808 = vld [vmem:[%s9 + $0x40] sm:$0xff]
    %v1809 = vld [vmem:[%s9 + $0x48] sm:$0xff]
    %v1810 = vld [vmem:[%s9 + $0x50] sm:$0xff]
    %v1811 = vld [vmem:[%s9 + $0x58] sm:$0xff]
    %v1812 = vld [vmem:[%s9 + $0x60] sm:$0xff]
    %v1813 = vld [vmem:[%s9 + $0x68] sm:$0xff]
    %v1814 = vld [vmem:[%s9 + $0x70] sm:$0xff]
    %v1815 = vld [vmem:[%s9 + $0x78] sm:$0xff]
    %v1816 = vld [vmem:[%s9 + $0x80] sm:$0xff]
    %v1817 = vld [vmem:[%s9 + $0x88] sm:$0xff]
    %v1818 = vld [vmem:[%s9 + $0x90] sm:$0xff]
    %v1819 = vld [vmem:[%s9 + $0x98] sm:$0xff]
    %v1820 = vld [vmem:[%s9 + $0xa0] sm:$0xff]
    %v1821 = vld [vmem:[%s9 + $0xa8] sm:$0xff]
    %v1822 = vld [vmem:[%s9 + $0xb0] sm:$0xff]
    %v1823 = vld [vmem:[%s9 + $0xb8] sm:$0xff]
    %v1824 = vld [vmem:[%s9 + $0xc0] sm:$0xff]
    %v1825 = vld [vmem:[%s9 + $0xc8] sm:$0xff]
    %v1826 = vld [vmem:[%s9 + $0xd0] sm:$0xff]
    %v1827 = vld [vmem:[%s9 + $0xd8] sm:$0xff]
    %v1828 = vld [vmem:[%s9 + $0xe0] sm:$0xff]
    %v1829 = vld [vmem:[%s9 + $0xe8] sm:$0xff]
    %v1830 = vld [vmem:[%s9 + $0xf0] sm:$0xff]
    %v1831 = vld [vmem:[%s9 + $0xf8] sm:$0xff]
    %v1832 = vld [vmem:[%s9 + $0x100] sm:$0xff]
    %v1833 = vld [vmem:[%s9 + $0x108] sm:$0xff]
    %v1834 = vld [vmem:[%s9 + $0x110] sm:$0xff]
    %v1835 = vld [vmem:[%s9 + $0x118] sm:$0xff]
    %v1836 = vld [vmem:[%s9 + $0x120] sm:$0xff]
    %v1837 = vld [vmem:[%s9 + $0x128] sm:$0xff]
    %v1838 = vld [vmem:[%s9 + $0x130] sm:$0xff]
    %v1839 = vld [vmem:[%s9 + $0x138] sm:$0xff]
    %v1840 = vld [vmem:[%s9 + $0x140] sm:$0xff]
    %v1841 = vld [vmem:[%s9 + $0x148] sm:$0xff]
    %v1842 = vld [vmem:[%s9 + $0x150] sm:$0xff]
    %v1843 = vld [vmem:[%s9 + $0x158] sm:$0xff]
    %v1844 = vld [vmem:[%s9 + $0x160] sm:$0xff]
    %v1845 = vld [vmem:[%s9 + $0x168] sm:$0xff]
    %v1846 = vld [vmem:[%s9 + $0x170] sm:$0xff]
    %v1847 = vld [vmem:[%s9 + $0x178] sm:$0xff]
    %v1848 = vld [vmem:[%s9 + $0x180] sm:$0xff]
    %v1849 = vld [vmem:[%s9 + $0x188] sm:$0xff]
    %v1850 = vld [vmem:[%s10] sm:$0x1]
    %v1852 = vlaneseq
    %v1853 = vshrl.u32 %v1852, 7
    %v1854 = vsub.s32 0, %v1853
    %v1855 = vrot.slane %v1850, %v1854
    %v1863 = vrot.slane %v1792, 7
    %vm1864 = vcmask 1041409
    %v1865 = vsel %vm1864, %v1863, %v1791
    %v1866 = vrot.slane %v1797, 7
    %v1867 = vsel %vm1864, %v1866, %v1796
    %v1868 = vrot.slane %v1799, 7
    %v1869 = vsel %vm1864, %v1868, %v1798
    %v1870 = vrot.slane %v1788, 7
    %v1871 = vsel %vm1864, %v1870, %v1786
    %vm1875 = vcmask 130048
    %v1876 = vsel %vm1875, %v1871, 0
    %1878 = vmatprep.subr.mxu0 0.0
    %1879 = vmatpush1.msra.mxu0 %v1815
    %1880 = vmatprep.subr.mxu0 0.0
    %1881 = vmatpush1.msra.mxu0 %v1814
    %1882 = vmatprep.subr.mxu0 0.0
    %1883 = vmatpush1.msra.mxu0 %v1813
    %1884 = vmatprep.subr.mxu0 0.0
    %1885 = vmatpush1.msra.mxu0 %v1812
    %1886 = vmatprep.subr.mxu0 0.0
    %1887 = vmatpush1.msra.mxu0 %v1811
    %1888 = vmatprep.subr.mxu0 0.0
    %1889 = vmatpush1.msra.mxu0 %v1810
    %1890 = vmatprep.subr.mxu0 0.0
    %1891 = vmatpush1.msra.mxu0 %v1809
    %1892 = vmatprep.subr.mxu0 0.0
    %1893 = vmatpush1.msra.mxu0 %v1808
    %1894 = vmatprep.subr.mxu0 0.0
    %1895 = vmatpush1.msra.mxu0 %v1807
    %1896 = vmatprep.subr.mxu0 0.0
    %1897 = vmatpush1.msra.mxu0 %v1806
    %1898 = vmatprep.subr.mxu0 0.0
    %1899 = vmatpush1.msra.mxu0 %v1805
    %1900 = vmatprep.subr.mxu0 0.0
    %1901 = vmatpush1.msra.mxu0 %v1804
    %1902 = vmatprep.subr.mxu0 0.0
    %1903 = vmatpush1.msra.mxu0 %v1803
    %1904 = vmatprep.subr.mxu0 0.0
    %1905 = vmatpush1.msra.mxu0 %v1802
    %1906 = vmatprep.subr.mxu0 0.0
    %1907 = vmatpush1.msra.mxu0 %v1801
    %1908 = vmatprep.subr.mxu0 0.0
    %1909 = vmatpush1.msra.mxu0 %v1800
    %1910 = vmatprep.subr.mxu0 0.0
    %1911 = vmatpush2.msra.mxu0 %v1831
    %1912 = vmatprep.subr.mxu0 0.0
    %1913 = vmatpush2.msra.mxu0 %v1830
    %1914 = vmatprep.subr.mxu0 0.0
    %1915 = vmatpush2.msra.mxu0 %v1829
    %1916 = vmatprep.subr.mxu0 0.0
    %1917 = vmatpush2.msra.mxu0 %v1828
    %1918 = vmatprep.subr.mxu0 0.0
    %1919 = vmatpush2.msra.mxu0 %v1827
    %1920 = vmatprep.subr.mxu0 0.0
    %1921 = vmatpush2.msra.mxu0 %v1826
    %1922 = vmatprep.subr.mxu0 0.0
    %1923 = vmatpush2.msra.mxu0 %v1825
    %1924 = vmatprep.subr.mxu0 0.0
    %1925 = vmatpush2.msra.mxu0 %v1824
    %1926 = vmatprep.subr.mxu0 0.0
    %1927 = vmatpush2.msra.mxu0 %v1823
    %1928 = vmatprep.subr.mxu0 0.0
    %1929 = vmatpush2.msra.mxu0 %v1822
    %1930 = vmatprep.subr.mxu0 0.0
    %1931 = vmatpush2.msra.mxu0 %v1821
    %1932 = vmatprep.subr.mxu0 0.0
    %1933 = vmatpush2.msra.mxu0 %v1820
    %1934 = vmatprep.subr.mxu0 0.0
    %1935 = vmatpush2.msra.mxu0 %v1819
    %1936 = vmatprep.subr.mxu0 0.0
    %1937 = vmatpush2.msra.mxu0 %v1818
    %1938 = vmatprep.subr.mxu0 0.0
    %1939 = vmatpush2.msra.mxu0 %v1817
    %1940 = vmatprep.subr.mxu0 0.0
    %1941 = vmatpush2.msra.mxu0 %v1816
    %1942 = vmatprep.mubr.f32.mxu0 %v1867
    %1943 = vmatmul.mubr.f32.gmra.mxu0 %v1865
    %v1944 = vpop.f32.mrf.mxu0
    %v1945 = vadd.f32 %v1855, %v1944
    %v1946 = vpop.f32.mrf.mxu0
    %1947 = vdwg.mxu0
    %1948 = vmatprep.subr.mxu0 0.0
    %1949 = vmatpush1.msra.mxu0 %v1847
    %1950 = vmatprep.subr.mxu0 0.0
    %1951 = vmatpush1.msra.mxu0 %v1846
    %1952 = vmatprep.subr.mxu0 0.0
    %1953 = vmatpush1.msra.mxu0 %v1845
    %1954 = vmatprep.subr.mxu0 0.0
    %1955 = vmatpush1.msra.mxu0 %v1844
    %1956 = vmatprep.subr.mxu0 0.0
    %1957 = vmatpush1.msra.mxu0 %v1843
    %1958 = vmatprep.subr.mxu0 0.0
    %1959 = vmatpush1.msra.mxu0 %v1842
    %1960 = vmatprep.subr.mxu0 0.0
    %1961 = vmatpush1.msra.mxu0 %v1841
    %1962 = vmatprep.subr.mxu0 0.0
    %1963 = vmatpush1.msra.mxu0 %v1840
    %1964 = vmatprep.subr.mxu0 0.0
    %1965 = vmatpush1.msra.mxu0 %v1839
    %1966 = vmatprep.subr.mxu0 0.0
    %1967 = vmatpush1.msra.mxu0 %v1838
    %1968 = vmatprep.subr.mxu0 0.0
    %1969 = vmatpush1.msra.mxu0 %v1837
    %1970 = vmatprep.subr.mxu0 0.0
    %1971 = vmatpush1.msra.mxu0 %v1836
    %1972 = vmatprep.subr.mxu0 0.0
    %1973 = vmatpush1.msra.mxu0 %v1835
    %1974 = vmatprep.subr.mxu0 0.0
    %1975 = vmatpush1.msra.mxu0 %v1834
    %1976 = vmatprep.subr.mxu0 0.0
    %1977 = vmatpush1.msra.mxu0 %v1833
    %1978 = vmatprep.subr.mxu0 0.0
    %1979 = vmatpush1.msra.mxu0 %v1832
    %1980 = vmatprep.subr.mxu0 0.0
    %1981 = vmatpush2.msra.mxu0 0.0
    %1982 = vmatprep.subr.mxu0 0.0
    %1983 = vmatpush2.msra.mxu0 0.0
    %1984 = vmatprep.subr.mxu0 0.0
    %1985 = vmatpush2.msra.mxu0 0.0
    %1986 = vmatprep.subr.mxu0 0.0
    %1987 = vmatpush2.msra.mxu0 0.0
    %1988 = vmatprep.subr.mxu0 0.0
    %1989 = vmatpush2.msra.mxu0 0.0
    %1990 = vmatprep.subr.mxu0 0.0
    %1991 = vmatpush2.msra.mxu0 0.0
    %1992 = vmatprep.subr.mxu0 0.0
    %1993 = vmatpush2.msra.mxu0 0.0
    %1994 = vmatprep.subr.mxu0 0.0
    %1995 = vmatpush2.msra.mxu0 0.0
    %1996 = vmatprep.subr.mxu0 0.0
    %1997 = vmatpush2.msra.mxu0 0.0
    %1998 = vmatprep.subr.mxu0 0.0
    %1999 = vmatpush2.msra.mxu0 0.0
    %2000 = vmatprep.subr.mxu0 0.0
    %2001 = vmatpush2.msra.mxu0 0.0
    %2002 = vmatprep.subr.mxu0 0.0
    %2003 = vmatpush2.msra.mxu0 0.0
    %2004 = vmatprep.subr.mxu0 0.0
    %2005 = vmatpush2.msra.mxu0 0.0
    %2006 = vmatprep.subr.mxu0 0.0
    %2007 = vmatpush2.msra.mxu0 0.0
    %2008 = vmatprep.subr.mxu0 0.0
    %2009 = vmatpush2.msra.mxu0 %v1849
    %2010 = vmatprep.subr.mxu0 0.0
    %2011 = vmatpush2.msra.mxu0 %v1848
    %2012 = vmatprep.mubr.f32.mxu0 %v1876
    %2013 = vmatmul.mubr.f32.gmra.mxu0 %v1869
    %v2014 = vpop.f32.mrf.mxu0
    %v2015 = vadd.f32 %v1945, %v2014
    %v2016 = vpop.f32.mrf.mxu0
    %2017 = vdwg.mxu0
    %v2018 = vtanh.pop %v2015
    %v2019 = vld [vmem:[%s11] sm:$0xff]
    %v2020 = vld [vmem:[%s11 + $0x8] sm:$0xff]
    %v2021 = vld [vmem:[%s11 + $0x10] sm:$0xff]
    %v2022 = vld [vmem:[%s11 + $0x18] sm:$0xff]
    %v2023 = vld [vmem:[%s11 + $0x20] sm:$0xff]
    %v2024 = vld [vmem:[%s11 + $0x28] sm:$0xff]
    %v2025 = vld [vmem:[%s11 + $0x30] sm:$0xff]
    %v2026 = vld [vmem:[%s11 + $0x38] sm:$0xff]
    %v2027 = vld [vmem:[%s11 + $0x40] sm:$0xff]
    %v2028 = vld [vmem:[%s11 + $0x48] sm:$0xff]
    %v2029 = vld [vmem:[%s11 + $0x50] sm:$0xff]
    %v2030 = vld [vmem:[%s11 + $0x58] sm:$0xff]
    %v2031 = vld [vmem:[%s11 + $0x60] sm:$0xff]
    %v2032 = vld [vmem:[%s11 + $0x68] sm:$0xff]
    %v2033 = vld [vmem:[%s11 + $0x70] sm:$0xff]
    %v2034 = vld [vmem:[%s12] sm:$0x1]
    %v2036 = vlaneseq
    %v2037 = vshrl.u32 %v2036, 7
    %v2038 = vsub.s32 0, %v2037
    %v2039 = vrot.slane %v2034, %v2038
    %vm2041 = vcmask 982016
    %v2043 = vsel %vm2041, %v2018, 0
    %2045 = vmatprep.subr.mxu0 0.0
    %2046 = vmatpush1.msra.mxu0 0.0
    %2047 = vmatprep.subr.mxu0 0.0
    %2048 = vmatpush1.msra.mxu0 %v2033
    %2049 = vmatprep.subr.mxu0 0.0
    %2050 = vmatpush1.msra.mxu0 %v2032
    %2051 = vmatprep.subr.mxu0 0.0
    %2052 = vmatpush1.msra.mxu0 %v2031
    %2053 = vmatprep.subr.mxu0 0.0
    %2054 = vmatpush1.msra.mxu0 %v2030
    %2055 = vmatprep.subr.mxu0 0.0
    %2056 = vmatpush1.msra.mxu0 %v2029
    %2057 = vmatprep.subr.mxu0 0.0
    %2058 = vmatpush1.msra.mxu0 %v2028
    %2059 = vmatprep.subr.mxu0 0.0
    %2060 = vmatpush1.msra.mxu0 %v2027
    %2061 = vmatprep.subr.mxu0 0.0
    %2062 = vmatpush1.msra.mxu0 %v2026
    %2063 = vmatprep.subr.mxu0 0.0
    %2064 = vmatpush1.msra.mxu0 %v2025
    %2065 = vmatprep.subr.mxu0 0.0
    %2066 = vmatpush1.msra.mxu0 %v2024
    %2067 = vmatprep.subr.mxu0 0.0
    %2068 = vmatpush1.msra.mxu0 %v2023
    %2069 = vmatprep.subr.mxu0 0.0
    %2070 = vmatpush1.msra.mxu0 %v2022
    %2071 = vmatprep.subr.mxu0 0.0
    %2072 = vmatpush1.msra.mxu0 %v2021
    %2073 = vmatprep.subr.mxu0 0.0
    %2074 = vmatpush1.msra.mxu0 %v2020
    %2075 = vmatprep.subr.mxu0 0.0
    %2076 = vmatpush1.msra.mxu0 %v2019
    %2077 = vmatprep.subr.mxu0 0.0
    %2078 = vmatpush2.msra.mxu0 0.0
    %2079 = vmatprep.subr.mxu0 0.0
    %2080 = vmatpush2.msra.mxu0 0.0
    %2081 = vmatprep.subr.mxu0 0.0
    %2082 = vmatpush2.msra.mxu0 0.0
    %2083 = vmatprep.subr.mxu0 0.0
    %2084 = vmatpush2.msra.mxu0 0.0
    %2085 = vmatprep.subr.mxu0 0.0
    %2086 = vmatpush2.msra.mxu0 0.0
    %2087 = vmatprep.subr.mxu0 0.0
    %2088 = vmatpush2.msra.mxu0 0.0
    %2089 = vmatprep.subr.mxu0 0.0
    %2090 = vmatpush2.msra.mxu0 0.0
    %2091 = vmatprep.subr.mxu0 0.0
    %2092 = vmatpush2.msra.mxu0 0.0
    %2093 = vmatprep.subr.mxu0 0.0
    %2094 = vmatpush2.msra.mxu0 0.0
    %2095 = vmatprep.subr.mxu0 0.0
    %2096 = vmatpush2.msra.mxu0 0.0
    %2097 = vmatprep.subr.mxu0 0.0
    %2098 = vmatpush2.msra.mxu0 0.0
    %2099 = vmatprep.subr.mxu0 0.0
    %2100 = vmatpush2.msra.mxu0 0.0
    %2101 = vmatprep.subr.mxu0 0.0
    %2102 = vmatpush2.msra.mxu0 0.0
    %2103 = vmatprep.subr.mxu0 0.0
    %2104 = vmatpush2.msra.mxu0 0.0
    %2105 = vmatprep.subr.mxu0 0.0
    %2106 = vmatpush2.msra.mxu0 0.0
    %2107 = vmatprep.subr.mxu0 0.0
    %2108 = vmatpush2.msra.mxu0 0.0
    %2109 = vmatprep.mubr.f32.mxu0 0.0
    %2110 = vmatmul.mubr.f32.gmra.mxu0 %v2043
    %v2111 = vpop.f32.mrf.mxu0
    %v2112 = vadd.f32 %v2039, %v2111
    %v2113 = vpop.f32.mrf.mxu0
    %2114 = vdwg.mxu0
    %v2115 = vtanh.pop %v2112
    %v2116 = vld [vmem:[%s13] sm:$0xff]
    %v2117 = vld [vmem:[%s13 + $0x8] sm:$0xff]
    %v2118 = vld [vmem:[%s13 + $0x10] sm:$0xff]
    %v2119 = vld [vmem:[%s13 + $0x18] sm:$0xff]
    %v2120 = vld [vmem:[%s13 + $0x20] sm:$0xff]
    %v2121 = vld [vmem:[%s13 + $0x28] sm:$0xff]
    %v2122 = vld [vmem:[%s13 + $0x30] sm:$0xff]
    %v2123 = vld [vmem:[%s13 + $0x38] sm:$0xff]
    %v2124 = vld [vmem:[%s13 + $0x40] sm:$0xff]
    %v2125 = vld [vmem:[%s13 + $0x48] sm:$0xff]
    %v2126 = vld [vmem:[%s13 + $0x50] sm:$0xf]
    %v2127 = vld [vmem:[%s14] sm:$0x1]
    %v2129 = vlaneseq
    %v2130 = vshrl.u32 %v2129, 7
    %v2131 = vsub.s32 0, %v2130
    %v2132 = vrot.slane %v2127, %v2131
    %v2135 = vsel %vm864, %v2115, 0
    %v2138 = vsel %vm184, %v2126, 0
    %2140 = vmatprep.subr.mxu0 0.0
    %2141 = vmatpush1.msra.mxu0 0.0
    %2142 = vmatprep.subr.mxu0 0.0
    %2143 = vmatpush1.msra.mxu0 0.0
    %2144 = vmatprep.subr.mxu0 0.0
    %2145 = vmatpush1.msra.mxu0 0.0
    %2146 = vmatprep.subr.mxu0 0.0
    %2147 = vmatpush1.msra.mxu0 0.0
    %2148 = vmatprep.subr.mxu0 0.0
    %2149 = vmatpush1.msra.mxu0 0.0
    %2150 = vmatprep.subr.mxu0 0.0
    %2151 = vmatpush1.msra.mxu0 %v2138
    %2152 = vmatprep.subr.mxu0 0.0
    %2153 = vmatpush1.msra.mxu0 %v2125
    %2154 = vmatprep.subr.mxu0 0.0
    %2155 = vmatpush1.msra.mxu0 %v2124
    %2156 = vmatprep.subr.mxu0 0.0
    %2157 = vmatpush1.msra.mxu0 %v2123
    %2158 = vmatprep.subr.mxu0 0.0
    %2159 = vmatpush1.msra.mxu0 %v2122
    %2160 = vmatprep.subr.mxu0 0.0
    %2161 = vmatpush1.msra.mxu0 %v2121
    %2162 = vmatprep.subr.mxu0 0.0
    %2163 = vmatpush1.msra.mxu0 %v2120
    %2164 = vmatprep.subr.mxu0 0.0
    %2165 = vmatpush1.msra.mxu0 %v2119
    %2166 = vmatprep.subr.mxu0 0.0
    %2167 = vmatpush1.msra.mxu0 %v2118
    %2168 = vmatprep.subr.mxu0 0.0
    %2169 = vmatpush1.msra.mxu0 %v2117
    %2170 = vmatprep.subr.mxu0 0.0
    %2171 = vmatpush1.msra.mxu0 %v2116
    %2172 = vmatprep.subr.mxu0 0.0
    %2173 = vmatpush2.msra.mxu0 0.0
    %2174 = vmatprep.subr.mxu0 0.0
    %2175 = vmatpush2.msra.mxu0 0.0
    %2176 = vmatprep.subr.mxu0 0.0
    %2177 = vmatpush2.msra.mxu0 0.0
    %2178 = vmatprep.subr.mxu0 0.0
    %2179 = vmatpush2.msra.mxu0 0.0
    %2180 = vmatprep.subr.mxu0 0.0
    %2181 = vmatpush2.msra.mxu0 0.0
    %2182 = vmatprep.subr.mxu0 0.0
    %2183 = vmatpush2.msra.mxu0 0.0
    %2184 = vmatprep.subr.mxu0 0.0
    %2185 = vmatpush2.msra.mxu0 0.0
    %2186 = vmatprep.subr.mxu0 0.0
    %2187 = vmatpush2.msra.mxu0 0.0
    %2188 = vmatprep.subr.mxu0 0.0
    %2189 = vmatpush2.msra.mxu0 0.0
    %2190 = vmatprep.subr.mxu0 0.0
    %2191 = vmatpush2.msra.mxu0 0.0
    %2192 = vmatprep.subr.mxu0 0.0
    %2193 = vmatpush2.msra.mxu0 0.0
    %2194 = vmatprep.subr.mxu0 0.0
    %2195 = vmatpush2.msra.mxu0 0.0
    %2196 = vmatprep.subr.mxu0 0.0
    %2197 = vmatpush2.msra.mxu0 0.0
    %2198 = vmatprep.subr.mxu0 0.0
    %2199 = vmatpush2.msra.mxu0 0.0
    %2200 = vmatprep.subr.mxu0 0.0
    %2201 = vmatpush2.msra.mxu0 0.0
    %2202 = vmatprep.subr.mxu0 0.0
    %2203 = vmatpush2.msra.mxu0 0.0
    %2204 = vmatprep.mubr.f32.mxu0 0.0
    %2205 = vmatmul.mubr.f32.gmra.mxu0 %v2135
    %v2206 = vpop.f32.mrf.mxu0
    %v2207 = vadd.f32 %v2132, %v2206
    %v2208 = vpop.f32.mrf.mxu0
    %2209 = vdwg.mxu0
    %vm2210 = vcmask 74752
    %v2211 = vsel %vm2210, %v2207, -inf
    %2212 = vmax.xlane.f32.xlu0 %v2211
    %v2213 = vpop.xlane.xlu0 %2212
    %v2214 = vsub.f32 %v2207, %v2213
    %v2215 = vmul.f32 %v2214, 1.442695
    %v2216 = vpow.pop %v2215
    %v2217 = vsel %vm2210, %v2216, 0.0
    %2218 = vadd.xlane.f32.xlu0 %v2217
    %v2219 = vpop.xlane.xlu0 %2218
    %v2220 = vlog2.pop %v2219
    %v2221 = vmul.f32 %v2220, 0.6931472
    %v2222 = vsub.f32 %v2214, %v2221
    %2223 = vst.msk [vmem:[#allocation2] sm:$0x3] %vm2210, %v2222
    // Predicated region
    $region62: #{lenet5_forward.1} parent=1 // pred_check
      _
    $region63: #{lenet5_forward.1} parent=1 // pred_check_branch
      %2225 = sbr.rel (0) target = $region65
    $region64: #{lenet5_forward.1} parent=1 // pred_region
      %s2227 = ssub.s32 32, 32
      %2228 = vsyncadd [#allocation3], %s2227
      %s2230 = sshll.u32 [#allocation2], 4
      %s2231 = int_to_ptr.vmem [resolvable:$true] %s2230
      %2233 = dma.vmem_to_hbm [thread:$0]  %s2231, 32, %s15, [#allocation3]
    $region65: #{lenet5_forward.1} parent=1 // pred_fallthru
      _
    // Predicated region
    $region66: #{lenet5_forward.1} parent=1 // pred_check
      _
    $region67: #{lenet5_forward.1} parent=1 // pred_check_branch
      %2235 = sbr.rel (0) target = $region69
    $region68: #{lenet5_forward.1} parent=1 // pred_region
      %2236 = dma.done [#allocation3], 32
    $region69: #{lenet5_forward.1} parent=1 // pred_fallthru
      _
    %2237 = vsyncpa [#allocation3], 1

</llo_original>
